<compile_context>
chip_gen: v5e
topology: v5e:2x2
jax: 0.10.0
libtpu: 0.0.40
codegen_flags: <defaults>
</compile_context>

<pallas_src>
import jax
import jax.numpy as jnp
import numpy as np
from jax.experimental import pallas as pl
from jax.experimental.pallas import tpu as pltpu

D_MODEL = 32
NUM_HEADS = 4
D_FF = 64
D_HEAD = D_MODEL // NUM_HEADS
EPS = 1e-5


def _make_kernel(with_attn):
    H, DH = NUM_HEADS, D_HEAD

    def kernel(x_ref, maskb_ref, wqkv_ref, bqkv_ref, woh_ref,
               w1_ref, bf1_ref, w2_ref, misc_ref, *out_refs):
        out_ref = out_refs[0]
        Bt, S, D = x_ref.shape
        n = Bt * S

        x = x_ref[...].reshape(n, D)                     # merge leading dims (free)
        # misc rows: 0=bo, 1=bf2, 2=gamma1, 3=beta1, 4=gamma2, 5=beta2 (all f32)
        bo, bf2 = misc_ref[0:1, :], misc_ref[1:2, :]
        g1, be1 = misc_ref[2:3, :], misc_ref[3:4, :]
        g2, be2 = misc_ref[4:5, :], misc_ref[5:6, :]

        def mm(a, w):
            # matmul-only dtype cast (bf16 weights on v6e/v7x); f32 accumulation
            return jnp.dot(a.astype(w.dtype), w, preferred_element_type=jnp.float32)

        # --- fused QKV projection: one MXU matmul over all rows ----------------
        # (q pre-scaled by 1/sqrt(dh) via the weights, done host-side)
        qkv = mm(x, wqkv_ref[...]) + bqkv_ref[...]
        q, k, v = qkv[:, 0:D], qkv[:, D:2 * D], qkv[:, 2 * D:3 * D]

        # --- restack heads once into head-major batch layout (H*Bt, S, DH) -----
        # Only cheap lane slices + leading-dim stacking here; no per-head
        # matmul / softmax / store below this point.
        def to_heads(t):
            parts = [t[:, h * DH:(h + 1) * DH].reshape(1, Bt, S, DH)
                     for h in range(H)]
            return jnp.concatenate(parts, axis=0).reshape(H * Bt, S, DH)

        qh, kh, vh = to_heads(q), to_heads(k), to_heads(v)

        # additive mask bias (0 / -1e9) broadcast over heads -> (H*Bt, 1, S)
        mask_bias = jnp.broadcast_to(maskb_ref[...][None],
                                     (H, Bt, 1, S)).reshape(H * Bt, 1, S)

        # --- attention: all heads in single batched einsums + one softmax ------
        scores = jnp.einsum('bqd,bkd->bqk', qh, kh,
                            preferred_element_type=jnp.float32) + mask_bias
        m_ = jnp.max(scores, axis=-1, keepdims=True)
        e_ = jnp.exp(scores - m_)
        attn = e_ / jnp.sum(e_, axis=-1, keepdims=True)   # exact softmax division
        if with_attn:
            out_refs[1][...] = attn.reshape(H, Bt, S, S)  # one store per grid step

        ctx = jnp.einsum('bqk,bkd->bqd', attn, vh,
                         preferred_element_type=jnp.float32)   # (H*Bt, S, DH)

        # --- single batched output projection + head reduction ------------------
        woh = woh_ref[...]                                # (H, DH, D)
        mha = jnp.sum(
            jnp.einsum('hnd,hde->hne',
                       ctx.reshape(H, n, DH).astype(woh.dtype), woh,
                       preferred_element_type=jnp.float32),
            axis=0) + bo                                  # (n, D)

        # --- ResidualLayerNorm 1 (dropout == identity, eval mode) ---------------
        r1 = mha + x
        mu1 = jnp.mean(r1, axis=-1, keepdims=True)
        var1 = jnp.mean((r1 - mu1) ** 2, axis=-1, keepdims=True)
        n1 = (r1 - mu1) * jax.lax.rsqrt(var1 + EPS) * g1 + be1

        # --- positional feed-forward (flattened rows) ----------------------------
        h1 = jnp.maximum(mm(n1, w1_ref[...]) + bf1_ref[...], 0.0)
        ff = mm(h1, w2_ref[...]) + bf2

        # --- ResidualLayerNorm 2 --------------------------------------------------
        r2 = ff + n1
        mu2 = jnp.mean(r2, axis=-1, keepdims=True)
        var2 = jnp.mean((r2 - mu2) ** 2, axis=-1, keepdims=True)
        n2 = (r2 - mu2) * jax.lax.rsqrt(var2 + EPS) * g2 + be2

        out_ref[...] = n2.reshape(Bt, S, D)

    return kernel


def encoder_layer(x, mask, params, *, block_b=None,
                  matmul_dtype=jnp.float32, return_attention=True):
    """matmul_dtype=jnp.bfloat16 recommended on v6e/v7x (2x MXU, half weight DMA);
    keep jnp.float32 on v5e unless only MXU operands are bf16 (which is what
    this kernel does anyway: all elementwise math stays f32)."""
    B, S, D = x.shape
    assert D == D_MODEL
    H, DH = NUM_HEADS, D_HEAD

    (wq, bq, wk, bk, wv, bv, wo, bo,
     g1, be1, w1, bf1, w2, bf2, g2, be2) = params

    # ---- host-side weight fusion / casting (once, outside the kernel) ---------
    mmdt = matmul_dtype
    scale = 1.0 / (DH ** 0.5)
    w_qkv = jnp.concatenate([wq * scale, wk, wv], axis=1).astype(mmdt)   # (D, 3D)
    b_qkv = jnp.concatenate([bq * scale, bk, bv], axis=1).astype(jnp.float32)
    wo_heads = wo.reshape(H, DH, D).astype(mmdt)                          # (H, dh, D)
    w1_c = w1.astype(mmdt)
    w2_c = w2.astype(mmdt)
    bf1_c = bf1.astype(jnp.float32)
    misc = jnp.concatenate([bo, bf2, g1, be1, g2, be2], axis=0).astype(jnp.float32)

    weights = (w_qkv, b_qkv, wo_heads, w1_c, bf1_c, w2_c, misc)

    # ---- batch-block selection -------------------------------------------------
    if block_b is None:
        target_rows = 256                      # Bt*S rows/step (feeds v6e/v7x MXU)
        block_b = max(1, min(B, target_rows // max(S, 1)))
        if B >= 2:                             # >= 2 grid steps -> v7x 2-TC sharding
            block_b = min(block_b, max(1, (B + 1) // 2))

        def step_bytes(bt):                    # double-buffered per-step blocks (f32)
            attn_b = bt * H * S * S * 4 if return_attention else 0
            return 2 * (2 * bt * S * D * 4 + attn_b + bt * S * 4)

        while block_b > 1 and step_bytes(block_b) > (24 << 20):
            block_b //= 2
    Bt = block_b

    # ---- pad B up to a multiple of Bt (padded rows are discarded) --------------
    B_pad = -(-B // Bt) * Bt
    mask_bias = jnp.where(mask == 0, -1e9, 0.0).astype(jnp.float32).reshape(B, 1, S)
    x_p = x.astype(jnp.float32)
    if B_pad != B:
        x_p = jnp.pad(x_p, ((0, B_pad - B), (0, 0), (0, 0)))
        mask_bias = jnp.pad(mask_bias, ((0, B_pad - B), (0, 0), (0, 0)))

    def full_spec(p):
        nd = p.ndim
        return pl.BlockSpec(p.shape, lambda b, _nd=nd: (0,) * _nd)

    in_specs = [
        pl.BlockSpec((Bt, S, D), lambda b: (b, 0, 0)),        # X block
        pl.BlockSpec((Bt, 1, S), lambda b: (b, 0, 0)),        # mask-bias block
    ] + [full_spec(p) for p in weights]

    out_specs = [pl.BlockSpec((Bt, S, D), lambda b: (b, 0, 0))]
    out_shape = [jax.ShapeDtypeStruct((B_pad, S, D), jnp.float32)]
    if return_attention:
        # head-major slab; transposed to (B, H, S, S) host-side (free)
        out_specs.append(pl.BlockSpec((H, Bt, S, S), lambda b: (0, b, 0, 0)))
        out_shape.append(jax.ShapeDtypeStruct((H, B_pad, S, S), jnp.float32))

    # explicit scoped-VMEM limit (v5e default is only 16 MiB)
    weight_bytes = sum(int(np.prod(w.shape)) * np.dtype(w.dtype).itemsize
                       for w in weights)
    step_b = 2 * (2 * Bt * S * D * 4
                  + (Bt * H * S * S * 4 if return_attention else 0)
                  + Bt * S * 4)
    vmem_limit = int(min(max(step_b + weight_bytes + (4 << 20), 16 << 20), 48 << 20))

    results = pl.pallas_call(
        _make_kernel(return_attention),
        out_shape=out_shape,
        grid_spec=pltpu.PrefetchScalarGridSpec(
            num_scalar_prefetch=0,
            grid=(B_pad // Bt,),
            in_specs=in_specs,
            out_specs=out_specs),
        compiler_params=pltpu.CompilerParams(
            dimension_semantics=("parallel",),
            vmem_limit_bytes=vmem_limit),
    )(x_p, mask_bias, *weights)

    out = results[0][:B]
    if return_attention:
        attn = jnp.transpose(results[1][:, :B], (1, 0, 2, 3))
        return out, attn
    return out


def reference(x, mask, params):
    (wq, bq, wk, bk, wv, bv, wo, bo,
     g1, be1, w1, bf1, w2, bf2, g2, be2) = params
    B, S, D = x.shape
    mask_bias = jnp.where(mask == 0, -1e9, 0.0).astype(jnp.float32)[:, None, None, :]

    def split(t):  # (B,S,D) -> (B,H,S,dh)
        return t.reshape(B, S, NUM_HEADS, D_HEAD).transpose(0, 2, 1, 3)

    q, k, v = split(x @ wq + bq), split(x @ wk + bk), split(x @ wv + bv)
    scores = jnp.einsum("bhqd,bhkd->bhqk", q, k) / jnp.sqrt(jnp.float32(D_HEAD))
    scores = scores + mask_bias
    attn = jax.nn.softmax(scores, axis=-1)
    ctx = jnp.einsum("bhqk,bhkd->bhqd", attn, v).transpose(0, 2, 1, 3).reshape(B, S, D)
    mha = ctx @ wo + bo

    def ln(t, g, b):
        mu = jnp.mean(t, axis=-1, keepdims=True)
        var = jnp.mean((t - mu) ** 2, axis=-1, keepdims=True)
        return (t - mu) * jax.lax.rsqrt(var + EPS) * g + b

    n1 = ln(mha + x, g1, be1)
    ff = jnp.maximum(n1 @ w1 + bf1, 0.0) @ w2 + bf2
    n2 = ln(ff + n1, g2, be2)
    return n2, attn


def init_params(key):
    ks = jax.random.split(key, 8)

    def lin(k, din, dout):
        return (jax.random.normal(k, (din, dout), jnp.float32) * 0.1,
                jnp.zeros((1, dout), jnp.float32))

    wq, bq = lin(ks[0], D_MODEL, D_MODEL)
    wk, bk = lin(ks[1], D_MODEL, D_MODEL)
    wv, bv = lin(ks[2], D_MODEL, D_MODEL)
    wo, bo = lin(ks[3], D_MODEL, D_MODEL)
    g1, be1 = jnp.ones((1, D_MODEL), jnp.float32), jnp.zeros((1, D_MODEL), jnp.float32)
    w1, bf1 = lin(ks[4], D_MODEL, D_FF)
    w2, bf2 = lin(ks[5], D_FF, D_MODEL)
    g2, be2 = jnp.ones((1, D_MODEL), jnp.float32), jnp.zeros((1, D_MODEL), jnp.float32)
    return (wq, bq, wk, bk, wv, bv, wo, bo,
            g1, be1, w1, bf1, w2, bf2, g2, be2)


if __name__ == "__main__":
    B, S = 2, 8
    key = jax.random.PRNGKey(0)
    kx, kp = jax.random.split(key)
    x = jax.random.normal(kx, (B, S, D_MODEL), jnp.float32)
    mask = jnp.ones((B, S), jnp.float32).at[1, -2:].set(0.0)  # mask last 2 tokens of batch 1
    params = init_params(kp)

    out, attn = encoder_layer(x, mask, params)
    out = jax.block_until_ready(out)
    attn = jax.block_until_ready(attn)

    out_ref, attn_ref = reference(x, mask, params)
    np.testing.assert_allclose(np.asarray(attn), np.asarray(attn_ref), atol=1e-3, rtol=1e-3)
    np.testing.assert_allclose(np.asarray(out), np.asarray(out_ref), atol=1e-3, rtol=1e-3)

    print("KERNEL_OK")
</pallas_src>

<mosaic_0001>
module attributes {stable_mosaic.version = 11 : i64} {
  func.func @kernel(%arg0: i32, %arg1: memref<1x8x32xf32, #tpu.memory_space<vmem>>, %arg2: memref<1x1x8xf32, #tpu.memory_space<vmem>>, %arg3: memref<32x96xf32, #tpu.memory_space<vmem>>, %arg4: memref<1x96xf32, #tpu.memory_space<vmem>>, %arg5: memref<4x8x32xf32, #tpu.memory_space<vmem>>, %arg6: memref<32x64xf32, #tpu.memory_space<vmem>>, %arg7: memref<1x64xf32, #tpu.memory_space<vmem>>, %arg8: memref<64x32xf32, #tpu.memory_space<vmem>>, %arg9: memref<6x32xf32, #tpu.memory_space<vmem>>, %arg10: memref<1x8x32xf32, #tpu.memory_space<vmem>>, %arg11: memref<4x1x8x8xf32, #tpu.memory_space<vmem>>) attributes {dimension_semantics = [#tpu.dimension_semantics<parallel>], iteration_bounds = array<i64: 2>, scalar_prefetch = 0 : i64, scratch_operands = 0 : i64, tpu.core_type = #tpu.core_type<tc>, window_params = [{transform_indices = @transform_0, window_bounds = array<i64: 1, 8, 32>}, {transform_indices = @transform_1, window_bounds = array<i64: 1, 1, 8>}, {pipeline_mode = #tpu.pipeline_mode<synchronous>, transform_indices = @transform_2, window_bounds = array<i64: 32, 96>}, {pipeline_mode = #tpu.pipeline_mode<synchronous>, transform_indices = @transform_3, window_bounds = array<i64: 1, 96>}, {pipeline_mode = #tpu.pipeline_mode<synchronous>, transform_indices = @transform_4, window_bounds = array<i64: 4, 8, 32>}, {pipeline_mode = #tpu.pipeline_mode<synchronous>, transform_indices = @transform_5, window_bounds = array<i64: 32, 64>}, {pipeline_mode = #tpu.pipeline_mode<synchronous>, transform_indices = @transform_6, window_bounds = array<i64: 1, 64>}, {pipeline_mode = #tpu.pipeline_mode<synchronous>, transform_indices = @transform_7, window_bounds = array<i64: 64, 32>}, {pipeline_mode = #tpu.pipeline_mode<synchronous>, transform_indices = @transform_8, window_bounds = array<i64: 6, 32>}, {transform_indices = @transform_9, window_bounds = array<i64: 1, 8, 32>}, {transform_indices = @transform_10, window_bounds = array<i64: 4, 1, 8, 8>}]} {
    %c0 = arith.constant 0 : index
    %c0_0 = arith.constant 0 : index
    %c0_1 = arith.constant 0 : index
    %0 = vector.load %arg1[%c0, %c0_0, %c0_1] : memref<1x8x32xf32, #tpu.memory_space<vmem>>, vector<1x8x32xf32>
    %1 = vector.shape_cast %0 : vector<1x8x32xf32> to vector<8x32xf32>
    %c0_2 = arith.constant 0 : index
    %c0_3 = arith.constant 0 : index
    %2 = vector.load %arg9[%c0_2, %c0_3] : memref<6x32xf32, #tpu.memory_space<vmem>>, vector<1x32xf32>
    %c1 = arith.constant 1 : index
    %c0_4 = arith.constant 0 : index
    %3 = vector.load %arg9[%c1, %c0_4] : memref<6x32xf32, #tpu.memory_space<vmem>>, vector<1x32xf32>
    %c2 = arith.constant 2 : index
    %c0_5 = arith.constant 0 : index
    %4 = vector.load %arg9[%c2, %c0_5] : memref<6x32xf32, #tpu.memory_space<vmem>>, vector<1x32xf32>
    %c3 = arith.constant 3 : index
    %c0_6 = arith.constant 0 : index
    %5 = vector.load %arg9[%c3, %c0_6] : memref<6x32xf32, #tpu.memory_space<vmem>>, vector<1x32xf32>
    %c4 = arith.constant 4 : index
    %c0_7 = arith.constant 0 : index
    %6 = vector.load %arg9[%c4, %c0_7] : memref<6x32xf32, #tpu.memory_space<vmem>>, vector<1x32xf32>
    %c5 = arith.constant 5 : index
    %c0_8 = arith.constant 0 : index
    %7 = vector.load %arg9[%c5, %c0_8] : memref<6x32xf32, #tpu.memory_space<vmem>>, vector<1x32xf32>
    %c0_9 = arith.constant 0 : index
    %c0_10 = arith.constant 0 : index
    %8 = vector.load %arg3[%c0_9, %c0_10] : memref<32x96xf32, #tpu.memory_space<vmem>>, vector<32x96xf32>
    %cst = arith.constant dense<0.000000e+00> : vector<8x96xf32>
    %9 = tpu.matmul %1, %8, %cst {dimension_numbers = #tpu.dot_dimension_numbers<[1], [0], [0], [1], [0, 0, 1, 1], [], []>} : vector<8x32xf32>, vector<32x96xf32>, vector<8x96xf32> -> vector<8x96xf32>
    %c0_11 = arith.constant 0 : index
    %c0_12 = arith.constant 0 : index
    %10 = vector.load %arg4[%c0_11, %c0_12] : memref<1x96xf32, #tpu.memory_space<vmem>>, vector<1x96xf32>
    %11 = vector.broadcast %10 : vector<1x96xf32> to vector<8x96xf32>
    %12 = arith.addf %9, %11 : vector<8x96xf32>
    %13 = vector.extract_strided_slice %12 {offsets = [0, 0], sizes = [8, 32], strides = [1, 1]} : vector<8x96xf32> to vector<8x32xf32>
    %14 = vector.extract_strided_slice %12 {offsets = [0, 32], sizes = [8, 32], strides = [1, 1]} : vector<8x96xf32> to vector<8x32xf32>
    %15 = vector.extract_strided_slice %12 {offsets = [0, 64], sizes = [8, 32], strides = [1, 1]} : vector<8x96xf32> to vector<8x32xf32>
    %16 = vector.extract_strided_slice %13 {offsets = [0, 0], sizes = [8, 8], strides = [1, 1]} : vector<8x32xf32> to vector<8x8xf32>
    %17 = vector.shape_cast %16 : vector<8x8xf32> to vector<1x1x8x8xf32>
    %18 = vector.extract_strided_slice %13 {offsets = [0, 8], sizes = [8, 8], strides = [1, 1]} : vector<8x32xf32> to vector<8x8xf32>
    %19 = vector.shape_cast %18 : vector<8x8xf32> to vector<1x1x8x8xf32>
    %20 = vector.extract_strided_slice %13 {offsets = [0, 16], sizes = [8, 8], strides = [1, 1]} : vector<8x32xf32> to vector<8x8xf32>
    %21 = vector.shape_cast %20 : vector<8x8xf32> to vector<1x1x8x8xf32>
    %22 = vector.extract_strided_slice %13 {offsets = [0, 24], sizes = [8, 8], strides = [1, 1]} : vector<8x32xf32> to vector<8x8xf32>
    %23 = vector.shape_cast %22 : vector<8x8xf32> to vector<1x1x8x8xf32>
    %24 = tpu.concatenate %17, %19, %21, %23 in 0 : vector<1x1x8x8xf32>, vector<1x1x8x8xf32>, vector<1x1x8x8xf32>, vector<1x1x8x8xf32> -> vector<4x1x8x8xf32>
    %25 = vector.shape_cast %24 : vector<4x1x8x8xf32> to vector<4x8x8xf32>
    %26 = vector.extract_strided_slice %14 {offsets = [0, 0], sizes = [8, 8], strides = [1, 1]} : vector<8x32xf32> to vector<8x8xf32>
    %27 = vector.shape_cast %26 : vector<8x8xf32> to vector<1x1x8x8xf32>
    %28 = vector.extract_strided_slice %14 {offsets = [0, 8], sizes = [8, 8], strides = [1, 1]} : vector<8x32xf32> to vector<8x8xf32>
    %29 = vector.shape_cast %28 : vector<8x8xf32> to vector<1x1x8x8xf32>
    %30 = vector.extract_strided_slice %14 {offsets = [0, 16], sizes = [8, 8], strides = [1, 1]} : vector<8x32xf32> to vector<8x8xf32>
    %31 = vector.shape_cast %30 : vector<8x8xf32> to vector<1x1x8x8xf32>
    %32 = vector.extract_strided_slice %14 {offsets = [0, 24], sizes = [8, 8], strides = [1, 1]} : vector<8x32xf32> to vector<8x8xf32>
    %33 = vector.shape_cast %32 : vector<8x8xf32> to vector<1x1x8x8xf32>
    %34 = tpu.concatenate %27, %29, %31, %33 in 0 : vector<1x1x8x8xf32>, vector<1x1x8x8xf32>, vector<1x1x8x8xf32>, vector<1x1x8x8xf32> -> vector<4x1x8x8xf32>
    %35 = vector.shape_cast %34 : vector<4x1x8x8xf32> to vector<4x8x8xf32>
    %36 = vector.extract_strided_slice %15 {offsets = [0, 0], sizes = [8, 8], strides = [1, 1]} : vector<8x32xf32> to vector<8x8xf32>
    %37 = vector.shape_cast %36 : vector<8x8xf32> to vector<1x1x8x8xf32>
    %38 = vector.extract_strided_slice %15 {offsets = [0, 8], sizes = [8, 8], strides = [1, 1]} : vector<8x32xf32> to vector<8x8xf32>
    %39 = vector.shape_cast %38 : vector<8x8xf32> to vector<1x1x8x8xf32>
    %40 = vector.extract_strided_slice %15 {offsets = [0, 16], sizes = [8, 8], strides = [1, 1]} : vector<8x32xf32> to vector<8x8xf32>
    %41 = vector.shape_cast %40 : vector<8x8xf32> to vector<1x1x8x8xf32>
    %42 = vector.extract_strided_slice %15 {offsets = [0, 24], sizes = [8, 8], strides = [1, 1]} : vector<8x32xf32> to vector<8x8xf32>
    %43 = vector.shape_cast %42 : vector<8x8xf32> to vector<1x1x8x8xf32>
    %44 = tpu.concatenate %37, %39, %41, %43 in 0 : vector<1x1x8x8xf32>, vector<1x1x8x8xf32>, vector<1x1x8x8xf32>, vector<1x1x8x8xf32> -> vector<4x1x8x8xf32>
    %45 = vector.shape_cast %44 : vector<4x1x8x8xf32> to vector<4x8x8xf32>
    %c0_13 = arith.constant 0 : index
    %c0_14 = arith.constant 0 : index
    %c0_15 = arith.constant 0 : index
    %46 = vector.load %arg2[%c0_13, %c0_14, %c0_15] : memref<1x1x8xf32, #tpu.memory_space<vmem>>, vector<1x1x8xf32>
    %47 = vector.shape_cast %46 : vector<1x1x8xf32> to vector<1x1x1x8xf32>
    %48 = vector.shape_cast %47 : vector<1x1x1x8xf32> to vector<1x1x1x8xf32>
    %49 = vector.broadcast %48 : vector<1x1x1x8xf32> to vector<4x1x1x8xf32>
    %50 = vector.shape_cast %49 : vector<4x1x1x8xf32> to vector<4x1x8xf32>
    "tpu.trace_start"() <{level = 10 : i32, message = "bqd,bkd->bqk"}> : () -> ()
    %cst_16 = arith.constant dense<0.000000e+00> : vector<4x8x8xf32>
    %51 = tpu.matmul %25, %35, %cst_16 {dimension_numbers = #tpu.dot_dimension_numbers<[2], [2], [1], [1], [0, 0, 0, 1, 1, 1], [0], [0]>} : vector<4x8x8xf32>, vector<4x8x8xf32>, vector<4x8x8xf32> -> vector<4x8x8xf32>
    "tpu.trace_stop"() : () -> ()
    %52 = vector.broadcast %50 : vector<4x1x8xf32> to vector<4x8x8xf32>
    %53 = arith.addf %51, %52 : vector<4x8x8xf32>
    %cst_17 = arith.constant dense<0xFF800000> : vector<4x8xf32>
    %54 = vector.multi_reduction <maximumf>, %53, %cst_17 [2] : vector<4x8x8xf32> to vector<4x8xf32>
    %55 = vector.shape_cast %54 : vector<4x8xf32> to vector<4x8x1xf32>
    %56 = vector.broadcast %55 : vector<4x8x1xf32> to vector<4x8x8xf32>
    %57 = arith.subf %53, %56 : vector<4x8x8xf32>
    %58 = math.exp %57 : vector<4x8x8xf32>
    %cst_18 = arith.constant dense<0.000000e+00> : vector<4x8xf32>
    %59 = vector.multi_reduction <add>, %58, %cst_18 [2] : vector<4x8x8xf32> to vector<4x8xf32>
    %60 = vector.shape_cast %59 : vector<4x8xf32> to vector<4x8x1xf32>
    %61 = vector.broadcast %60 : vector<4x8x1xf32> to vector<4x8x8xf32>
    %62 = arith.divf %58, %61 : vector<4x8x8xf32>
    %63 = vector.shape_cast %62 : vector<4x8x8xf32> to vector<4x1x8x8xf32>
    %c0_19 = arith.constant 0 : index
    %c0_20 = arith.constant 0 : index
    %c0_21 = arith.constant 0 : index
    %c0_22 = arith.constant 0 : index
    %64 = vector.load %arg11[%c0_19, %c0_20, %c0_21, %c0_22] : memref<4x1x8x8xf32, #tpu.memory_space<vmem>>, vector<4x1x8x8xf32>
    tpu.vector_store %arg11[%c0_19, %c0_20, %c0_21, %c0_22], %63 {strides = array<i32>} : memref<4x1x8x8xf32, #tpu.memory_space<vmem>>, vector<4x1x8x8xf32>,
    "tpu.trace_start"() <{level = 10 : i32, message = "bqk,bkd->bqd"}> : () -> ()
    %cst_23 = arith.constant dense<0.000000e+00> : vector<4x8x8xf32>
    %65 = tpu.matmul %62, %45, %cst_23 {dimension_numbers = #tpu.dot_dimension_numbers<[2], [1], [1], [2], [0, 0, 0, 1, 1, 2], [0], [0]>} : vector<4x8x8xf32>, vector<4x8x8xf32>, vector<4x8x8xf32> -> vector<4x8x8xf32>
    "tpu.trace_stop"() : () -> ()
    %c0_24 = arith.constant 0 : index
    %c0_25 = arith.constant 0 : index
    %c0_26 = arith.constant 0 : index
    %66 = vector.load %arg5[%c0_24, %c0_25, %c0_26] : memref<4x8x32xf32, #tpu.memory_space<vmem>>, vector<4x8x32xf32>
    "tpu.trace_start"() <{level = 10 : i32, message = "hnd,hde->hne"}> : () -> ()
    %cst_27 = arith.constant dense<0.000000e+00> : vector<4x8x32xf32>
    %67 = tpu.matmul %65, %66, %cst_27 {dimension_numbers = #tpu.dot_dimension_numbers<[2], [1], [1], [2], [0, 0, 0, 1, 1, 2], [0], [0]>} : vector<4x8x8xf32>, vector<4x8x32xf32>, vector<4x8x32xf32> -> vector<4x8x32xf32>
    "tpu.trace_stop"() : () -> ()
    %cst_28 = arith.constant dense<0.000000e+00> : vector<8x32xf32>
    %68 = vector.multi_reduction <add>, %67, %cst_28 [0] : vector<4x8x32xf32> to vector<8x32xf32>
    %69 = vector.broadcast %2 : vector<1x32xf32> to vector<8x32xf32>
    %70 = arith.addf %68, %69 : vector<8x32xf32>
    %71 = arith.addf %70, %1 : vector<8x32xf32>
    %cst_29 = arith.constant dense<0.000000e+00> : vector<8xf32>
    %72 = vector.multi_reduction <add>, %71, %cst_29 [1] : vector<8x32xf32> to vector<8xf32>
    %73 = vector.shape_cast %72 : vector<8xf32> to vector<8x1xf32>
    %cst_30 = arith.constant 3.200000e+01 : f32
    %74 = vector.broadcast %cst_30 : f32 to vector<8x1xf32>
    %75 = arith.divf %73, %74 : vector<8x1xf32>
    %76 = vector.broadcast %75 : vector<8x1xf32> to vector<8x32xf32>
    %77 = arith.subf %71, %76 : vector<8x32xf32>
    %78 = arith.mulf %77, %77 : vector<8x32xf32>
    %cst_31 = arith.constant dense<0.000000e+00> : vector<8xf32>
    %79 = vector.multi_reduction <add>, %78, %cst_31 [1] : vector<8x32xf32> to vector<8xf32>
    %80 = vector.shape_cast %79 : vector<8xf32> to vector<8x1xf32>
    %cst_32 = arith.constant 3.200000e+01 : f32
    %81 = vector.broadcast %cst_32 : f32 to vector<8x1xf32>
    %82 = arith.divf %80, %81 : vector<8x1xf32>
    %83 = vector.broadcast %75 : vector<8x1xf32> to vector<8x32xf32>
    %84 = arith.subf %71, %83 : vector<8x32xf32>
    %cst_33 = arith.constant 9.99999974E-6 : f32
    %85 = vector.broadcast %cst_33 : f32 to vector<8x1xf32>
    %86 = arith.addf %82, %85 : vector<8x1xf32>
    %87 = math.rsqrt %86 : vector<8x1xf32>
    %88 = vector.broadcast %87 : vector<8x1xf32> to vector<8x32xf32>
    %89 = arith.mulf %84, %88 : vector<8x32xf32>
    %90 = vector.broadcast %4 : vector<1x32xf32> to vector<8x32xf32>
    %91 = arith.mulf %89, %90 : vector<8x32xf32>
    %92 = vector.broadcast %5 : vector<1x32xf32> to vector<8x32xf32>
    %93 = arith.addf %91, %92 : vector<8x32xf32>
    %c0_34 = arith.constant 0 : index
    %c0_35 = arith.constant 0 : index
    %94 = vector.load %arg6[%c0_34, %c0_35] : memref<32x64xf32, #tpu.memory_space<vmem>>, vector<32x64xf32>
    %cst_36 = arith.constant dense<0.000000e+00> : vector<8x64xf32>
    %95 = tpu.matmul %93, %94, %cst_36 {dimension_numbers = #tpu.dot_dimension_numbers<[1], [0], [0], [1], [0, 0, 1, 1], [], []>} : vector<8x32xf32>, vector<32x64xf32>, vector<8x64xf32> -> vector<8x64xf32>
    %c0_37 = arith.constant 0 : index
    %c0_38 = arith.constant 0 : index
    %96 = vector.load %arg7[%c0_37, %c0_38] : memref<1x64xf32, #tpu.memory_space<vmem>>, vector<1x64xf32>
    %97 = vector.broadcast %96 : vector<1x64xf32> to vector<8x64xf32>
    %98 = arith.addf %95, %97 : vector<8x64xf32>
    %cst_39 = arith.constant 0.000000e+00 : f32
    %99 = vector.broadcast %cst_39 : f32 to vector<8x64xf32>
    %100 = arith.maximumf %98, %99 : vector<8x64xf32>
    %c0_40 = arith.constant 0 : index
    %c0_41 = arith.constant 0 : index
    %101 = vector.load %arg8[%c0_40, %c0_41] : memref<64x32xf32, #tpu.memory_space<vmem>>, vector<64x32xf32>
    %cst_42 = arith.constant dense<0.000000e+00> : vector<8x32xf32>
    %102 = tpu.matmul %100, %101, %cst_42 {dimension_numbers = #tpu.dot_dimension_numbers<[1], [0], [0], [1], [0, 0, 1, 1], [], []>} : vector<8x64xf32>, vector<64x32xf32>, vector<8x32xf32> -> vector<8x32xf32>
    %103 = vector.broadcast %3 : vector<1x32xf32> to vector<8x32xf32>
    %104 = arith.addf %102, %103 : vector<8x32xf32>
    %105 = arith.addf %104, %93 : vector<8x32xf32>
    %cst_43 = arith.constant dense<0.000000e+00> : vector<8xf32>
    %106 = vector.multi_reduction <add>, %105, %cst_43 [1] : vector<8x32xf32> to vector<8xf32>
    %107 = vector.shape_cast %106 : vector<8xf32> to vector<8x1xf32>
    %cst_44 = arith.constant 3.200000e+01 : f32
    %108 = vector.broadcast %cst_44 : f32 to vector<8x1xf32>
    %109 = arith.divf %107, %108 : vector<8x1xf32>
    %110 = vector.broadcast %109 : vector<8x1xf32> to vector<8x32xf32>
    %111 = arith.subf %105, %110 : vector<8x32xf32>
    %112 = arith.mulf %111, %111 : vector<8x32xf32>
    %cst_45 = arith.constant dense<0.000000e+00> : vector<8xf32>
    %113 = vector.multi_reduction <add>, %112, %cst_45 [1] : vector<8x32xf32> to vector<8xf32>
    %114 = vector.shape_cast %113 : vector<8xf32> to vector<8x1xf32>
    %cst_46 = arith.constant 3.200000e+01 : f32
    %115 = vector.broadcast %cst_46 : f32 to vector<8x1xf32>
    %116 = arith.divf %114, %115 : vector<8x1xf32>
    %117 = vector.broadcast %109 : vector<8x1xf32> to vector<8x32xf32>
    %118 = arith.subf %105, %117 : vector<8x32xf32>
    %cst_47 = arith.constant 9.99999974E-6 : f32
    %119 = vector.broadcast %cst_47 : f32 to vector<8x1xf32>
    %120 = arith.addf %116, %119 : vector<8x1xf32>
    %121 = math.rsqrt %120 : vector<8x1xf32>
    %122 = vector.broadcast %121 : vector<8x1xf32> to vector<8x32xf32>
    %123 = arith.mulf %118, %122 : vector<8x32xf32>
    %124 = vector.broadcast %6 : vector<1x32xf32> to vector<8x32xf32>
    %125 = arith.mulf %123, %124 : vector<8x32xf32>
    %126 = vector.broadcast %7 : vector<1x32xf32> to vector<8x32xf32>
    %127 = arith.addf %125, %126 : vector<8x32xf32>
    %128 = vector.shape_cast %127 : vector<8x32xf32> to vector<1x8x32xf32>
    %c0_48 = arith.constant 0 : index
    %c0_49 = arith.constant 0 : index
    %c0_50 = arith.constant 0 : index
    %129 = vector.load %arg10[%c0_48, %c0_49, %c0_50] : memref<1x8x32xf32, #tpu.memory_space<vmem>>, vector<1x8x32xf32>
    tpu.vector_store %arg10[%c0_48, %c0_49, %c0_50], %128 {strides = array<i32>} : memref<1x8x32xf32, #tpu.memory_space<vmem>>, vector<1x8x32xf32>,
    return
  }
  func.func @transform_0(%arg0: i32) -> (i32, i32, i32) {
    %c0_i32 = arith.constant 0 : i32
    %c0_i32_0 = arith.constant 0 : i32
    %c0_i32_1 = arith.constant 0 : i32
    return %arg0, %c0_i32, %c0_i32_0 : i32, i32, i32
  }
  func.func @transform_1(%arg0: i32) -> (i32, i32, i32) {
    %c0_i32 = arith.constant 0 : i32
    %c0_i32_0 = arith.constant 0 : i32
    %c0_i32_1 = arith.constant 0 : i32
    return %arg0, %c0_i32, %c0_i32_0 : i32, i32, i32
  }
  func.func @transform_2(%arg0: i32) -> (i32, i32) {
    %c0_i32 = arith.constant 0 : i32
    %c0_i32_0 = arith.constant 0 : i32
    %c0_i32_1 = arith.constant 0 : i32
    return %c0_i32, %c0_i32_0 : i32, i32
  }
  func.func @transform_3(%arg0: i32) -> (i32, i32) {
    %c0_i32 = arith.constant 0 : i32
    %c0_i32_0 = arith.constant 0 : i32
    %c0_i32_1 = arith.constant 0 : i32
    return %c0_i32, %c0_i32_0 : i32, i32
  }
  func.func @transform_4(%arg0: i32) -> (i32, i32, i32) {
    %c0_i32 = arith.constant 0 : i32
    %c0_i32_0 = arith.constant 0 : i32
    %c0_i32_1 = arith.constant 0 : i32
    %c0_i32_2 = arith.constant 0 : i32
    return %c0_i32, %c0_i32_0, %c0_i32_1 : i32, i32, i32
  }
  func.func @transform_5(%arg0: i32) -> (i32, i32) {
    %c0_i32 = arith.constant 0 : i32
    %c0_i32_0 = arith.constant 0 : i32
    %c0_i32_1 = arith.constant 0 : i32
    return %c0_i32, %c0_i32_0 : i32, i32
  }
  func.func @transform_6(%arg0: i32) -> (i32, i32) {
    %c0_i32 = arith.constant 0 : i32
    %c0_i32_0 = arith.constant 0 : i32
    %c0_i32_1 = arith.constant 0 : i32
    return %c0_i32, %c0_i32_0 : i32, i32
  }
  func.func @transform_7(%arg0: i32) -> (i32, i32) {
    %c0_i32 = arith.constant 0 : i32
    %c0_i32_0 = arith.constant 0 : i32
    %c0_i32_1 = arith.constant 0 : i32
    return %c0_i32, %c0_i32_0 : i32, i32
  }
  func.func @transform_8(%arg0: i32) -> (i32, i32) {
    %c0_i32 = arith.constant 0 : i32
    %c0_i32_0 = arith.constant 0 : i32
    %c0_i32_1 = arith.constant 0 : i32
    return %c0_i32, %c0_i32_0 : i32, i32
  }
  func.func @transform_9(%arg0: i32) -> (i32, i32, i32) {
    %c0_i32 = arith.constant 0 : i32
    %c0_i32_0 = arith.constant 0 : i32
    %c0_i32_1 = arith.constant 0 : i32
    return %arg0, %c0_i32, %c0_i32_0 : i32, i32, i32
  }
  func.func @transform_10(%arg0: i32) -> (i32, i32, i32, i32) {
    %c0_i32 = arith.constant 0 : i32
    %c0_i32_0 = arith.constant 0 : i32
    %c0_i32_1 = arith.constant 0 : i32
    %c0_i32_2 = arith.constant 0 : i32
    return %c0_i32, %arg0, %c0_i32_0, %c0_i32_1 : i32, i32, i32, i32
  }
}

</mosaic_0001>

<llo_original>
// kernel: tpu_custom_call.1
$region0: #{tpu_custom_call.1}
  #allocation0 [shape = 'u32[]', space=smem, size = 0x4, offset = 0x4, fixed_abs, tag = 'smem constant byte address 0x4 - core index']
  #allocation1 [shape = 'u32[72,128]{1,0:T(1,128)}', space=vmem, size = 0x9000, scoped, tag = 'internal scratch']
  %s0 = inlined_call_operand.hbm [shape: f32[2,8,32], index: 0, kind: input, shape index: {}]
  %s1 = inlined_call_operand.hbm [shape: f32[2,1,8], index: 1, kind: input, shape index: {}]
  %s2 = inlined_call_operand.vmem [shape: f32[32,96], index: 2, kind: input, shape index: {}]
  %s3 = inlined_call_operand.vmem [shape: f32[1,96], index: 3, kind: input, shape index: {}]
  %s4 = inlined_call_operand.vmem [shape: f32[4,8,32], index: 4, kind: input, shape index: {}]
  %s5 = inlined_call_operand.vmem [shape: f32[32,64], index: 5, kind: input, shape index: {}]
  %s6 = inlined_call_operand.vmem [shape: f32[1,64], index: 6, kind: input, shape index: {}]
  %s7 = inlined_call_operand.vmem [shape: f32[64,32], index: 7, kind: input, shape index: {}]
  %s8 = inlined_call_operand.hbm [shape: f32[6,32], index: 8, kind: input, shape index: {}]
  %s9 = inlined_call_operand.hbm [shape: f32[2,8,32], index: 9, kind: output, shape index: {0}]
  %s10 = inlined_call_operand.hbm [shape: f32[4,2,8,8], index: 10, kind: output, shape index: {1}]
  %11 = xla_tuple %s9, %s10
  %s12 = sld [smem:[#allocation0]]
  $region89: #{tpu_custom_call.1} parent=0
    _
  %s14 = ssub.s32 1, %s12
  %s15 = scalar_select 0, %s14, %s12
  $region1: #{tpu_custom_call.1} parent=0
    #allocation2 [shape = 'u8[8192]{0}', space=vmem, size = 0x2000, scoped, tag = 'input window, operand 0']
    #allocation3 [shape = 's32[2]{0}', space=sflag, size = 0x8, scoped, tag = 'scoped memory for tpu_custom_call.1']
    #allocation4 [shape = 's32[2]{0}', space=sflag, size = 0x8, scoped, tag = 'scoped memory for tpu_custom_call.1']
    #allocation5 [shape = 'u8[1024]{0}', space=vmem, size = 0x400, scoped, tag = 'input window, operand 1']
    #allocation6 [shape = 's32[2]{0}', space=sflag, size = 0x8, scoped, tag = 'scoped memory for tpu_custom_call.1']
    #allocation7 [shape = 'u8[4096]{0}', space=vmem, size = 0x1000, scoped, tag = 'input window, operand 8, single buffered']
    #allocation8 [shape = 'u8[8192]{0}', space=vmem, size = 0x2000, scoped, tag = 'output window, operand 0']
    #allocation9 [shape = 'u8[32768]{0}', space=vmem, size = 0x8000, scoped, tag = 'output window, operand 1']
    #allocation10 [shape = 's32[2]{0}', space=sflag, size = 0x8, scoped, tag = 'scoped memory for tpu_custom_call.1']
    %16 = vsyncpa [#allocation3], 0
    %s17 = scalar_lea.sflag [#allocation3], 1
    %18 = vsyncpa %s17, 0
    %19 = vsyncpa [#allocation6], 0
    %s20 = scalar_lea.sflag [#allocation6], 1
    %21 = vsyncpa %s20, 0
    %22 = vsyncpa [#allocation4], 0
    %s23 = scalar_lea.sflag [#allocation4], 1
    %24 = vsyncpa %s23, 0
    %25 = vsyncpa [#allocation10], 0
    %s26 = scalar_lea.sflag [#allocation10], 1
    %27 = vsyncpa %s26, 0
    loop: start=0, step=1, limit=4
    $region2: #{tpu_custom_call.1} parent=1 // loop_pre_header
      _
    $region3: #{tpu_custom_call.1} parent=1 // loop_header
      %s29 = sphi 0, %s33
      %p30 = scmp.ge.s32.totalorder %s29, 4
      %s39 = sphi 0, %s41
      %s42 = sphi 0, %s39
      %s43 = sphi 0, %s42
      %s59 = sphi 0, %s43
      %s65 = sphi 0, %s67
      %s68 = sphi 0, %s65
      %s69 = sphi 0, %s68
      %s85 = sphi 0, %s69
      %s89 = sphi 0, %s89
      %s91 = sphi 0, %s89
      %s92 = sphi 0, %s91
      %s106 = sphi 0, %s92
      %s110 = sphi 0, %s110
      %s112 = sphi 0, %s110
      %s113 = sphi 0, %s112
      %s127 = sphi 0, %s113
      %s131 = sphi 0, %s131
      %s133 = sphi 0, %s131
      %s134 = sphi 0, %s133
      %s148 = sphi 0, %s134
      %s152 = sphi 0, %s152
      %s154 = sphi 0, %s152
      %s155 = sphi 0, %s154
      %s169 = sphi 0, %s155
      %s173 = sphi 0, %s173
      %s175 = sphi 0, %s173
      %s176 = sphi 0, %s175
      %s190 = sphi 0, %s176
      %s194 = sphi 0, %s194
      %s196 = sphi 0, %s194
      %s197 = sphi 0, %s196
      %s211 = sphi 0, %s197
      %s215 = sphi 0, %s215
      %s217 = sphi 0, %s215
      %s218 = sphi 0, %s217
      %s232 = sphi 0, %s218
      %s238 = sphi 0, %s240
      %s241 = sphi 0, %s238
      %s242 = sphi 0, %s241
      %s258 = sphi 0, %s242
      %s264 = sphi 0, %s266
      %s267 = sphi 0, %s264
      %s268 = sphi 0, %s267
      %s284 = sphi 0, %s268
    $region4: #{tpu_custom_call.1} parent=1 // loop_header_branch
      %32 = sbr.rel (%p30) target = $region8
    $region5: #{tpu_custom_call.1} parent=1 // loop_body
      %s34 = ssub.s32 %s29, 1
      %s35 = ssub.s32 %s29, 2
      %s36 = sadd.s32 %s29, 1
      %s37 = ssub.s32 %s29, %s36
      %p38 = scmp.eq.s32.totalorder %s37, 0
      %s40 = sadd.s32 %s39, 1
      %s41 = scalar_select %p38, %s39, %s40
      %p44 = pneg %p38
      %p45 = scmp.eq.s32.totalorder %s29, 1
      %p46 = por %p44, %p45
      %p47 = scmp.ne.s32.totalorder %s39, %s42
      %p48 = scmp.eq.s32.totalorder %s29, 0
      %p49 = por %p47, %p48
      %p50 = scmp.ne.s32.totalorder %s39, %s42
      %p51 = scmp.eq.s32.totalorder %s34, 1
      %p52 = por %p50, %p51
      %p53 = scmp.ne.s32.totalorder %s42, %s43
      %p54 = scmp.eq.s32.totalorder %s34, 0
      %p55 = por %p53, %p54
      %p56 = scmp.ne.s32.totalorder %s42, %s43
      %p57 = scmp.eq.s32.totalorder %s35, 1
      %p58 = por %p56, %p57
      %p60 = scmp.ne.s32.totalorder %s43, %s59
      %p61 = scmp.eq.s32.totalorder %s35, 0
      %p62 = por %p60, %p61
      %s63 = ssub.s32 %s29, %s36
      %p64 = scmp.eq.s32.totalorder %s63, 0
      %s66 = sadd.s32 %s65, 1
      %s67 = scalar_select %p64, %s65, %s66
      %p70 = pneg %p64
      %p71 = scmp.eq.s32.totalorder %s29, 1
      %p72 = por %p70, %p71
      %p73 = scmp.ne.s32.totalorder %s65, %s68
      %p74 = scmp.eq.s32.totalorder %s29, 0
      %p75 = por %p73, %p74
      %p76 = scmp.ne.s32.totalorder %s65, %s68
      %p77 = scmp.eq.s32.totalorder %s34, 1
      %p78 = por %p76, %p77
      %p79 = scmp.ne.s32.totalorder %s68, %s69
      %p80 = scmp.eq.s32.totalorder %s34, 0
      %p81 = por %p79, %p80
      %p82 = scmp.ne.s32.totalorder %s68, %s69
      %p83 = scmp.eq.s32.totalorder %s35, 1
      %p84 = por %p82, %p83
      %p86 = scmp.ne.s32.totalorder %s69, %s85
      %p87 = scmp.eq.s32.totalorder %s35, 0
      %p88 = por %p86, %p87
      %s90 = sadd.s32 %s89, 1
      %p93 = scmp.eq.s32.totalorder %s29, 1
      %p94 = scmp.ne.s32.totalorder %s89, %s91
      %p95 = scmp.eq.s32.totalorder %s29, 0
      %p96 = por %p94, %p95
      %p97 = scmp.ne.s32.totalorder %s89, %s91
      %p98 = scmp.eq.s32.totalorder %s34, 1
      %p99 = por %p97, %p98
      %p100 = scmp.ne.s32.totalorder %s91, %s92
      %p101 = scmp.eq.s32.totalorder %s34, 0
      %p102 = por %p100, %p101
      %p103 = scmp.ne.s32.totalorder %s91, %s92
      %p104 = scmp.eq.s32.totalorder %s35, 1
      %p105 = por %p103, %p104
      %p107 = scmp.ne.s32.totalorder %s92, %s106
      %p108 = scmp.eq.s32.totalorder %s35, 0
      %p109 = por %p107, %p108
      %s111 = sadd.s32 %s110, 1
      %p114 = scmp.eq.s32.totalorder %s29, 1
      %p115 = scmp.ne.s32.totalorder %s110, %s112
      %p116 = scmp.eq.s32.totalorder %s29, 0
      %p117 = por %p115, %p116
      %p118 = scmp.ne.s32.totalorder %s110, %s112
      %p119 = scmp.eq.s32.totalorder %s34, 1
      %p120 = por %p118, %p119
      %p121 = scmp.ne.s32.totalorder %s112, %s113
      %p122 = scmp.eq.s32.totalorder %s34, 0
      %p123 = por %p121, %p122
      %p124 = scmp.ne.s32.totalorder %s112, %s113
      %p125 = scmp.eq.s32.totalorder %s35, 1
      %p126 = por %p124, %p125
      %p128 = scmp.ne.s32.totalorder %s113, %s127
      %p129 = scmp.eq.s32.totalorder %s35, 0
      %p130 = por %p128, %p129
      %s132 = sadd.s32 %s131, 1
      %p135 = scmp.eq.s32.totalorder %s29, 1
      %p136 = scmp.ne.s32.totalorder %s131, %s133
      %p137 = scmp.eq.s32.totalorder %s29, 0
      %p138 = por %p136, %p137
      %p139 = scmp.ne.s32.totalorder %s131, %s133
      %p140 = scmp.eq.s32.totalorder %s34, 1
      %p141 = por %p139, %p140
      %p142 = scmp.ne.s32.totalorder %s133, %s134
      %p143 = scmp.eq.s32.totalorder %s34, 0
      %p144 = por %p142, %p143
      %p145 = scmp.ne.s32.totalorder %s133, %s134
      %p146 = scmp.eq.s32.totalorder %s35, 1
      %p147 = por %p145, %p146
      %p149 = scmp.ne.s32.totalorder %s134, %s148
      %p150 = scmp.eq.s32.totalorder %s35, 0
      %p151 = por %p149, %p150
      %s153 = sadd.s32 %s152, 1
      %p156 = scmp.eq.s32.totalorder %s29, 1
      %p157 = scmp.ne.s32.totalorder %s152, %s154
      %p158 = scmp.eq.s32.totalorder %s29, 0
      %p159 = por %p157, %p158
      %p160 = scmp.ne.s32.totalorder %s152, %s154
      %p161 = scmp.eq.s32.totalorder %s34, 1
      %p162 = por %p160, %p161
      %p163 = scmp.ne.s32.totalorder %s154, %s155
      %p164 = scmp.eq.s32.totalorder %s34, 0
      %p165 = por %p163, %p164
      %p166 = scmp.ne.s32.totalorder %s154, %s155
      %p167 = scmp.eq.s32.totalorder %s35, 1
      %p168 = por %p166, %p167
      %p170 = scmp.ne.s32.totalorder %s155, %s169
      %p171 = scmp.eq.s32.totalorder %s35, 0
      %p172 = por %p170, %p171
      %s174 = sadd.s32 %s173, 1
      %p177 = scmp.eq.s32.totalorder %s29, 1
      %p178 = scmp.ne.s32.totalorder %s173, %s175
      %p179 = scmp.eq.s32.totalorder %s29, 0
      %p180 = por %p178, %p179
      %p181 = scmp.ne.s32.totalorder %s173, %s175
      %p182 = scmp.eq.s32.totalorder %s34, 1
      %p183 = por %p181, %p182
      %p184 = scmp.ne.s32.totalorder %s175, %s176
      %p185 = scmp.eq.s32.totalorder %s34, 0
      %p186 = por %p184, %p185
      %p187 = scmp.ne.s32.totalorder %s175, %s176
      %p188 = scmp.eq.s32.totalorder %s35, 1
      %p189 = por %p187, %p188
      %p191 = scmp.ne.s32.totalorder %s176, %s190
      %p192 = scmp.eq.s32.totalorder %s35, 0
      %p193 = por %p191, %p192
      %s195 = sadd.s32 %s194, 1
      %p198 = scmp.eq.s32.totalorder %s29, 1
      %p199 = scmp.ne.s32.totalorder %s194, %s196
      %p200 = scmp.eq.s32.totalorder %s29, 0
      %p201 = por %p199, %p200
      %p202 = scmp.ne.s32.totalorder %s194, %s196
      %p203 = scmp.eq.s32.totalorder %s34, 1
      %p204 = por %p202, %p203
      %p205 = scmp.ne.s32.totalorder %s196, %s197
      %p206 = scmp.eq.s32.totalorder %s34, 0
      %p207 = por %p205, %p206
      %p208 = scmp.ne.s32.totalorder %s196, %s197
      %p209 = scmp.eq.s32.totalorder %s35, 1
      %p210 = por %p208, %p209
      %p212 = scmp.ne.s32.totalorder %s197, %s211
      %p213 = scmp.eq.s32.totalorder %s35, 0
      %p214 = por %p212, %p213
      %s216 = sadd.s32 %s215, 1
      %p219 = scmp.eq.s32.totalorder %s29, 1
      %p220 = scmp.ne.s32.totalorder %s215, %s217
      %p221 = scmp.eq.s32.totalorder %s29, 0
      %p222 = por %p220, %p221
      %p223 = scmp.ne.s32.totalorder %s215, %s217
      %p224 = scmp.eq.s32.totalorder %s34, 1
      %p225 = por %p223, %p224
      %p226 = scmp.ne.s32.totalorder %s217, %s218
      %p227 = scmp.eq.s32.totalorder %s34, 0
      %p228 = por %p226, %p227
      %p229 = scmp.ne.s32.totalorder %s217, %s218
      %p230 = scmp.eq.s32.totalorder %s35, 1
      %p231 = por %p229, %p230
      %p233 = scmp.ne.s32.totalorder %s218, %s232
      %p234 = scmp.eq.s32.totalorder %s35, 0
      %p235 = por %p233, %p234
      %s236 = ssub.s32 %s29, %s36
      %p237 = scmp.eq.s32.totalorder %s236, 0
      %s239 = sadd.s32 %s238, 1
      %s240 = scalar_select %p237, %s238, %s239
      %p243 = pneg %p237
      %p244 = scmp.eq.s32.totalorder %s29, 1
      %p245 = por %p243, %p244
      %p246 = scmp.ne.s32.totalorder %s238, %s241
      %p247 = scmp.eq.s32.totalorder %s29, 0
      %p248 = por %p246, %p247
      %p249 = scmp.ne.s32.totalorder %s238, %s241
      %p250 = scmp.eq.s32.totalorder %s34, 1
      %p251 = por %p249, %p250
      %p252 = scmp.ne.s32.totalorder %s241, %s242
      %p253 = scmp.eq.s32.totalorder %s34, 0
      %p254 = por %p252, %p253
      %p255 = scmp.ne.s32.totalorder %s241, %s242
      %p256 = scmp.eq.s32.totalorder %s35, 1
      %p257 = por %p255, %p256
      %p259 = scmp.ne.s32.totalorder %s242, %s258
      %p260 = scmp.eq.s32.totalorder %s35, 0
      %p261 = por %p259, %p260
      %s262 = ssub.s32 %s29, %s36
      %p263 = scmp.eq.s32.totalorder %s262, 0
      %s265 = sadd.s32 %s264, 1
      %s266 = scalar_select %p263, %s264, %s265
      %p269 = pneg %p263
      %p270 = scmp.eq.s32.totalorder %s29, 1
      %p271 = por %p269, %p270
      %p272 = scmp.ne.s32.totalorder %s264, %s267
      %p273 = scmp.eq.s32.totalorder %s29, 0
      %p274 = por %p272, %p273
      %p275 = scmp.ne.s32.totalorder %s264, %s267
      %p276 = scmp.eq.s32.totalorder %s34, 1
      %p277 = por %p275, %p276
      %p278 = scmp.ne.s32.totalorder %s267, %s268
      %p279 = scmp.eq.s32.totalorder %s34, 0
      %p280 = por %p278, %p279
      %p281 = scmp.ne.s32.totalorder %s267, %s268
      %p282 = scmp.eq.s32.totalorder %s35, 1
      %p283 = por %p281, %p282
      %p285 = scmp.ne.s32.totalorder %s268, %s284
      %p286 = scmp.eq.s32.totalorder %s35, 0
      %p287 = por %p285, %p286
      %p288 = scmp.le.s32.totalorder 1, %s29
      %p289 = scmp.lt.s32.totalorder %s29, 3
      %p290 = pnand %p288, %p289
      %p291 = pneg %p290
      // Predicated region
      $region9: #{tpu_custom_call.1} parent=5 // pred_check
        _
      $region10: #{tpu_custom_call.1} parent=5 // pred_check_branch
        %293 = sbr.rel (%p290) target = $region12
      $region11: #{tpu_custom_call.1} parent=5 // pred_region
        %s294 = ssub.s32 %s29, 1
        // Predicated region
        $region13: #{tpu_custom_call.1} parent=11 // pred_check
          %p295 = pneg %p102
        $region14: #{tpu_custom_call.1} parent=11 // pred_check_branch
          %297 = sbr.rel (%p295) target = $region16
        $region15: #{tpu_custom_call.1} parent=11 // pred_region
          _
        $region16: #{tpu_custom_call.1} parent=11 // pred_fallthru
          _
        // Predicated region
        $region17: #{tpu_custom_call.1} parent=11 // pred_check
          %p298 = pneg %p123
        $region18: #{tpu_custom_call.1} parent=11 // pred_check_branch
          %300 = sbr.rel (%p298) target = $region20
        $region19: #{tpu_custom_call.1} parent=11 // pred_region
          _
        $region20: #{tpu_custom_call.1} parent=11 // pred_fallthru
          _
        // Predicated region
        $region21: #{tpu_custom_call.1} parent=11 // pred_check
          %p301 = pneg %p144
        $region22: #{tpu_custom_call.1} parent=11 // pred_check_branch
          %303 = sbr.rel (%p301) target = $region24
        $region23: #{tpu_custom_call.1} parent=11 // pred_region
          _
        $region24: #{tpu_custom_call.1} parent=11 // pred_fallthru
          _
        // Predicated region
        $region25: #{tpu_custom_call.1} parent=11 // pred_check
          %p304 = pneg %p165
        $region26: #{tpu_custom_call.1} parent=11 // pred_check_branch
          %306 = sbr.rel (%p304) target = $region28
        $region27: #{tpu_custom_call.1} parent=11 // pred_region
          _
        $region28: #{tpu_custom_call.1} parent=11 // pred_fallthru
          _
        // Predicated region
        $region29: #{tpu_custom_call.1} parent=11 // pred_check
          %p307 = pneg %p186
        $region30: #{tpu_custom_call.1} parent=11 // pred_check_branch
          %309 = sbr.rel (%p307) target = $region32
        $region31: #{tpu_custom_call.1} parent=11 // pred_region
          _
        $region32: #{tpu_custom_call.1} parent=11 // pred_fallthru
          _
        // Predicated region
        $region33: #{tpu_custom_call.1} parent=11 // pred_check
          %p310 = pneg %p207
        $region34: #{tpu_custom_call.1} parent=11 // pred_check_branch
          %312 = sbr.rel (%p310) target = $region36
        $region35: #{tpu_custom_call.1} parent=11 // pred_region
          _
        $region36: #{tpu_custom_call.1} parent=11 // pred_fallthru
          _
        // Predicated region
        $region37: #{tpu_custom_call.1} parent=11 // pred_check
          %p313 = pneg %p228
        $region38: #{tpu_custom_call.1} parent=11 // pred_check_branch
          %315 = sbr.rel (%p313) target = $region40
        $region39: #{tpu_custom_call.1} parent=11 // pred_region
          %317 = vsyncadd [#allocation6], 0
          %s319 = sshll.u32 %s8, 4
          %s320 = int_to_ptr.hbm [resolvable:$true] %s319
          %s321 = sshll.u32 [#allocation7], 4
          %s322 = int_to_ptr.vmem [resolvable:$true] %s321
          %324 = dma.hbm_to_vmem [thread:$0]  %s320, 128, %s322, [#allocation6]
        $region40: #{tpu_custom_call.1} parent=11 // pred_fallthru
          _
      $region12: #{tpu_custom_call.1} parent=5 // pred_fallthru
        _
      %p325 = scmp.lt.s32.totalorder %s29, 2
      // Predicated region
      $region41: #{tpu_custom_call.1} parent=5 // pred_check
        %p326 = pneg %p325
      $region42: #{tpu_custom_call.1} parent=5 // pred_check_branch
        %328 = sbr.rel (%p326) target = $region44
      $region43: #{tpu_custom_call.1} parent=5 // pred_region
        // Predicated region
        $region45: #{tpu_custom_call.1} parent=43 // pred_check
          %p329 = pneg %p49
        $region46: #{tpu_custom_call.1} parent=43 // pred_check_branch
          %331 = sbr.rel (%p329) target = $region48
        $region47: #{tpu_custom_call.1} parent=43 // pred_region
          %s332 = sand.u32 %s39, 1
          %s333 = scalar_lea.sflag [#allocation3], %s332
          %s334 = sand.u32 %s39, 1
          %s335 = smul.addr %s334, 8
          %s336 = scalar_lea.vmem [#allocation2], %s335
          %338 = vsyncadd %s333, 0
          %s339 = smul.addr %s29, 8
          %s340 = scalar_lea.hbm %s0, %s339
          %s342 = sshll.u32 %s340, 4
          %s343 = int_to_ptr.hbm [resolvable:$true] %s342
          %s344 = sshll.u32 %s336, 4
          %s345 = int_to_ptr.vmem [resolvable:$true] %s344
          %347 = dma.hbm_to_vmem [thread:$0]  %s343, 128, %s345, %s333
        $region48: #{tpu_custom_call.1} parent=43 // pred_fallthru
          _
        // Predicated region
        $region49: #{tpu_custom_call.1} parent=43 // pred_check
          %p348 = pneg %p75
        $region50: #{tpu_custom_call.1} parent=43 // pred_check_branch
          %350 = sbr.rel (%p348) target = $region52
        $region51: #{tpu_custom_call.1} parent=43 // pred_region
          %s351 = sand.u32 %s29, 1
          %s352 = scalar_lea.sflag [#allocation6], %s351
          %s353 = sand.u32 %s65, 1
          %s354 = scalar_lea.vmem [#allocation5], %s353
          %356 = vsyncadd %s352, 0
          %s357 = scalar_lea.hbm %s1, %s29
          %s359 = sshll.u32 %s357, 4
          %s360 = int_to_ptr.hbm [resolvable:$true] %s359
          %s361 = sshll.u32 %s354, 4
          %s362 = int_to_ptr.vmem [resolvable:$true] %s361
          %364 = dma.hbm_to_vmem [thread:$0]  %s360, 16, %s362, %s352
        $region52: #{tpu_custom_call.1} parent=43 // pred_fallthru
          _
      $region44: #{tpu_custom_call.1} parent=5 // pred_fallthru
        _
      %p365 = scmp.le.s32.totalorder 1, %s29
      %p366 = scmp.lt.s32.totalorder %s29, 3
      %p367 = pnand %p365, %p366
      %p368 = pneg %p367
      // Predicated region
      $region53: #{tpu_custom_call.1} parent=5 // pred_check
        _
      $region54: #{tpu_custom_call.1} parent=5 // pred_check_branch
        %370 = sbr.rel (%p367) target = $region56
      $region55: #{tpu_custom_call.1} parent=5 // pred_region
        %s371 = ssub.s32 %s29, 1
        %s372 = sand.u32 %s42, 1
        %s373 = scalar_lea.sflag [#allocation3], %s372
        %s374 = sand.u32 %s42, 1
        %s375 = smul.addr %s374, 8
        %s376 = scalar_lea.vmem [#allocation2], %s375
        // Predicated region
        $region57: #{tpu_custom_call.1} parent=55 // pred_check
          %p377 = pneg %p55
        $region58: #{tpu_custom_call.1} parent=55 // pred_check_branch
          %379 = sbr.rel (%p377) target = $region60
        $region59: #{tpu_custom_call.1} parent=55 // pred_region
          %381 = dma.done %s373, 128
        $region60: #{tpu_custom_call.1} parent=55 // pred_fallthru
          _
        %s382 = sand.u32 %s34, 1
        %s383 = scalar_lea.sflag [#allocation6], %s382
        %s384 = sand.u32 %s68, 1
        %s385 = scalar_lea.vmem [#allocation5], %s384
        // Predicated region
        $region61: #{tpu_custom_call.1} parent=55 // pred_check
          %p386 = pneg %p81
        $region62: #{tpu_custom_call.1} parent=55 // pred_check_branch
          %388 = sbr.rel (%p386) target = $region64
        $region63: #{tpu_custom_call.1} parent=55 // pred_region
          %390 = dma.done %s383, 16
        $region64: #{tpu_custom_call.1} parent=55 // pred_fallthru
          _
        // Predicated region
        $region65: #{tpu_custom_call.1} parent=55 // pred_check
          %p391 = pneg %p228
        $region66: #{tpu_custom_call.1} parent=55 // pred_check_branch
          %393 = sbr.rel (%p391) target = $region68
        $region67: #{tpu_custom_call.1} parent=55 // pred_region
          %395 = dma.done [#allocation6], 128
        $region68: #{tpu_custom_call.1} parent=55 // pred_fallthru
          _
        %s396 = sand.u32 %s42, 1
        %s397 = scalar_lea.sflag [#allocation3], %s396
        %s398 = sand.u32 %s42, 1
        %s399 = smul.addr %s398, 8
        %s400 = scalar_lea.vmem [#allocation2], %s399
        %p401 = pneg %p55
        %p402 = pneg %p52
        %s403 = sand.u32 %s34, 1
        %s404 = scalar_lea.sflag [#allocation6], %s403
        %s405 = sand.u32 %s68, 1
        %s406 = scalar_lea.vmem [#allocation5], %s405
        %p407 = pneg %p81
        %p408 = pneg %p78
        %p409 = pneg %p102
        %p410 = pneg %p99
        %p411 = pneg %p123
        %p412 = pneg %p120
        %p413 = pneg %p144
        %p414 = pneg %p141
        %p415 = pneg %p165
        %p416 = pneg %p162
        %p417 = pneg %p186
        %p418 = pneg %p183
        %p419 = pneg %p207
        %p420 = pneg %p204
        %p421 = pneg %p228
        %p422 = pneg %p225
        %p423 = pneg %p254
        %p424 = pneg %p251
        %s425 = sand.u32 %s241, 1
        %s426 = scalar_lea.sflag [#allocation4], %s425
        %s427 = sand.u32 %s241, 1
        %s428 = smul.addr %s427, 8
        %s429 = scalar_lea.vmem [#allocation8], %s428
        %p430 = pneg %p280
        %p431 = pneg %p277
        %s432 = sand.u32 %s267, 1
        %s433 = scalar_lea.sflag [#allocation10], %s432
        %s434 = sand.u32 %s267, 1
        %s435 = smul.addr %s434, 32
        %s436 = scalar_lea.vmem [#allocation9], %s435
        %v437 = vld [vmem:[%s376] sm:$0xff]
        %v438 = vld [vmem:[#allocation7] sm:$0x1]
        %v439 = vld [vmem:[#allocation7 + $0x1] sm:$0x1]
        %v440 = vld [vmem:[#allocation7 + $0x2] sm:$0x1]
        %v441 = vld [vmem:[#allocation7 + $0x3] sm:$0x1]
        %v442 = vld [vmem:[#allocation7 + $0x4] sm:$0x1]
        %v443 = vld [vmem:[#allocation7 + $0x5] sm:$0x1]
        %v444 = vld [vmem:[%s2] sm:$0xff]
        %v445 = vld [vmem:[%s2 + $0x8] sm:$0xff]
        %v446 = vld [vmem:[%s2 + $0x10] sm:$0xff]
        %v447 = vld [vmem:[%s2 + $0x18] sm:$0xff]
        %v448 = vld [vmem:[%s3] sm:$0x1]
        %v450 = vperm.slane %v448, 0
        %vm452 = vcmask 261120
        %v454 = vsel %vm452, %v437, 0
        %456 = vmatpush.msra.mxu0 0.0
        %457 = vmatpush.msra.mxu0 0.0
        %458 = vmatpush.msra.mxu0 0.0
        %459 = vmatpush.msra.mxu0 0.0
        %460 = vmatpush.msra.mxu0 0.0
        %461 = vmatpush.msra.mxu0 0.0
        %462 = vmatpush.msra.mxu0 0.0
        %463 = vmatpush.msra.mxu0 0.0
        %464 = vmatpush.msra.mxu0 0.0
        %465 = vmatpush.msra.mxu0 0.0
        %466 = vmatpush.msra.mxu0 0.0
        %467 = vmatpush.msra.mxu0 0.0
        %468 = vmatpush.msra.mxu0 %v447
        %469 = vmatpush.msra.mxu0 %v446
        %470 = vmatpush.msra.mxu0 %v445
        %471 = vmatpush.msra.mxu0 %v444
        %472 = vmatmul.f32.gmra.mxu0 %v454
        %v473 = vpop.f32.mrf.mxu0
        %v474 = vadd.f32 %v450, %v473
        %475 = vdwg.mxu0
        %477 = vrot.lane.b32.xlu0 %v474, 120
        %v478 = vpop.permute.xlu0 %477
        %479 = vrot.lane.b32.xlu0 %v474, 112
        %v480 = vpop.permute.xlu0 %479
        %481 = vrot.lane.b32.xlu0 %v474, 104
        %v482 = vpop.permute.xlu0 %481
        %v483 = vld [vmem:[%s385] sm:$0x1]
        %v485 = vperm.slane %v483, 0
        %487 = vrot.lane.b32.xlu0 %v474, 96
        %v488 = vpop.permute.xlu0 %487
        %vm489 = vcmask 64512
        %v490 = vsel %vm489, %v474, 0
        %v492 = vsel %vm489, %v488, 0
        %494 = vmatpush.xpose.msra.mxu0 0.0
        %495 = vmatpush.xpose.msra.mxu0 0.0
        %496 = vmatpush.xpose.msra.mxu0 0.0
        %497 = vmatpush.xpose.msra.mxu0 0.0
        %498 = vmatpush.xpose.msra.mxu0 0.0
        %499 = vmatpush.xpose.msra.mxu0 0.0
        %500 = vmatpush.xpose.msra.mxu0 0.0
        %501 = vmatpush.xpose.msra.mxu0 0.0
        %502 = vmatpush.xpose.msra.mxu0 0.0
        %503 = vmatpush.xpose.msra.mxu0 0.0
        %504 = vmatpush.xpose.msra.mxu0 0.0
        %505 = vmatpush.xpose.msra.mxu0 0.0
        %506 = vmatpush.xpose.msra.mxu0 0.0
        %507 = vmatpush.xpose.msra.mxu0 0.0
        %508 = vmatpush.xpose.msra.mxu0 0.0
        %509 = vmatpush.xpose.msra.mxu0 %v492
        %510 = vmatmul.f32.gmra.mxu0 %v490
        %v511 = vpop.f32.mrf.mxu0
        %v512 = vadd.f32 %v485, %v511
        %513 = vdwg.mxu0
        %514 = vrot.lane.b32.xlu0 %v478, 96
        %v515 = vpop.permute.xlu0 %514
        %v516 = vsel %vm489, %v478, 0
        %v518 = vsel %vm489, %v515, 0
        %520 = vmatpush.xpose.msra.mxu0 0.0
        %521 = vmatpush.xpose.msra.mxu0 0.0
        %522 = vmatpush.xpose.msra.mxu0 0.0
        %523 = vmatpush.xpose.msra.mxu0 0.0
        %524 = vmatpush.xpose.msra.mxu0 0.0
        %525 = vmatpush.xpose.msra.mxu0 0.0
        %526 = vmatpush.xpose.msra.mxu0 0.0
        %527 = vmatpush.xpose.msra.mxu0 0.0
        %528 = vmatpush.xpose.msra.mxu0 0.0
        %529 = vmatpush.xpose.msra.mxu0 0.0
        %530 = vmatpush.xpose.msra.mxu0 0.0
        %531 = vmatpush.xpose.msra.mxu0 0.0
        %532 = vmatpush.xpose.msra.mxu0 0.0
        %533 = vmatpush.xpose.msra.mxu0 0.0
        %534 = vmatpush.xpose.msra.mxu0 0.0
        %535 = vmatpush.xpose.msra.mxu0 %v518
        %536 = vmatmul.f32.gmra.mxu0 %v516
        %v537 = vpop.f32.mrf.mxu0
        %v538 = vadd.f32 %v485, %v537
        %539 = vdwg.mxu0
        %540 = vrot.lane.b32.xlu0 %v480, 96
        %v541 = vpop.permute.xlu0 %540
        %v542 = vsel %vm489, %v480, 0
        %v544 = vsel %vm489, %v541, 0
        %546 = vmatpush.xpose.msra.mxu0 0.0
        %547 = vmatpush.xpose.msra.mxu0 0.0
        %548 = vmatpush.xpose.msra.mxu0 0.0
        %549 = vmatpush.xpose.msra.mxu0 0.0
        %550 = vmatpush.xpose.msra.mxu0 0.0
        %551 = vmatpush.xpose.msra.mxu0 0.0
        %552 = vmatpush.xpose.msra.mxu0 0.0
        %553 = vmatpush.xpose.msra.mxu0 0.0
        %554 = vmatpush.xpose.msra.mxu0 0.0
        %555 = vmatpush.xpose.msra.mxu0 0.0
        %556 = vmatpush.xpose.msra.mxu0 0.0
        %557 = vmatpush.xpose.msra.mxu0 0.0
        %558 = vmatpush.xpose.msra.mxu0 0.0
        %559 = vmatpush.xpose.msra.mxu0 0.0
        %560 = vmatpush.xpose.msra.mxu0 0.0
        %561 = vmatpush.xpose.msra.mxu0 %v544
        %562 = vmatmul.f32.gmra.mxu0 %v542
        %v563 = vpop.f32.mrf.mxu0
        %v564 = vadd.f32 %v485, %v563
        %565 = vdwg.mxu0
        %566 = vrot.lane.b32.xlu0 %v482, 96
        %v567 = vpop.permute.xlu0 %566
        %v568 = vsel %vm489, %v482, 0
        %v570 = vsel %vm489, %v567, 0
        %572 = vmatpush.xpose.msra.mxu0 0.0
        %573 = vmatpush.xpose.msra.mxu0 0.0
        %574 = vmatpush.xpose.msra.mxu0 0.0
        %575 = vmatpush.xpose.msra.mxu0 0.0
        %576 = vmatpush.xpose.msra.mxu0 0.0
        %577 = vmatpush.xpose.msra.mxu0 0.0
        %578 = vmatpush.xpose.msra.mxu0 0.0
        %579 = vmatpush.xpose.msra.mxu0 0.0
        %580 = vmatpush.xpose.msra.mxu0 0.0
        %581 = vmatpush.xpose.msra.mxu0 0.0
        %582 = vmatpush.xpose.msra.mxu0 0.0
        %583 = vmatpush.xpose.msra.mxu0 0.0
        %584 = vmatpush.xpose.msra.mxu0 0.0
        %585 = vmatpush.xpose.msra.mxu0 0.0
        %586 = vmatpush.xpose.msra.mxu0 0.0
        %587 = vmatpush.xpose.msra.mxu0 %v570
        %588 = vmatmul.f32.gmra.mxu0 %v568
        %v589 = vpop.f32.mrf.mxu0
        %v590 = vadd.f32 %v485, %v589
        %591 = vdwg.mxu0
        %v592 = vsel %vm489, %v512, -inf
        %593 = vmax.xlane.f32.xlu0 %v592
        %v594 = vpop.xlane.xlu0 %593
        %v595 = vsel %vm489, %v538, -inf
        %596 = vmax.xlane.f32.xlu0 %v595
        %v597 = vpop.xlane.xlu0 %596
        %v598 = vsel %vm489, %v564, -inf
        %599 = vmax.xlane.f32.xlu0 %v598
        %v600 = vpop.xlane.xlu0 %599
        %v601 = vsel %vm489, %v590, -inf
        %602 = vmax.xlane.f32.xlu0 %v601
        %v603 = vpop.xlane.xlu0 %602
        %v604 = vsub.f32 %v512, %v594
        %v605 = vsub.f32 %v538, %v597
        %v606 = vsub.f32 %v564, %v600
        %v607 = vsub.f32 %v590, %v603
        %v608 = vmul.f32 %v604, 1.442695
        %v609 = vpow.pop %v608
        %v610 = vmul.f32 %v605, 1.442695
        %v611 = vpow.pop %v610
        %v612 = vmul.f32 %v606, 1.442695
        %v613 = vpow.pop %v612
        %v614 = vmul.f32 %v607, 1.442695
        %v615 = vpow.pop %v614
        %v616 = vsel %vm489, %v609, 0.0
        %617 = vadd.xlane.f32.xlu0 %v616
        %v618 = vpop.xlane.xlu0 %617
        %v619 = vsel %vm489, %v611, 0.0
        %620 = vadd.xlane.f32.xlu0 %v619
        %v621 = vpop.xlane.xlu0 %620
        %v622 = vsel %vm489, %v613, 0.0
        %623 = vadd.xlane.f32.xlu0 %v622
        %v624 = vpop.xlane.xlu0 %623
        %v625 = vsel %vm489, %v615, 0.0
        %626 = vadd.xlane.f32.xlu0 %v625
        %v627 = vpop.xlane.xlu0 %626
        %v628 = vrcp.pop %v618
        %v629 = vmul.f32 %v618, %v628
        %v630 = vsub.f32 1.0, %v629
        %v631 = vmul.f32 %v628, %v630
        %v632 = vadd.f32 %v628, %v631
        %vm633 = vweird.f32 %v618
        %vm634 = vweird.f32 %v628
        %vm635 = vmor %vm633, %vm634
        %v636 = vsel %vm635, %v628, %v632
        %v637 = vand.u32 2147483647, %v618
        %vm638 = vcmp.eq.f32.partialorder %v637, 8.507059e+37
        %v639 = vand.u32 %v618, 2147483648
        %v640 = vor.u32 1.1754944e-38, %v639
        %v641 = vsel %vm638, %v640, %v636
        %v642 = vmul.f32 %v609, %v641
        %v643 = vrcp.pop %v621
        %v644 = vmul.f32 %v621, %v643
        %v645 = vsub.f32 1.0, %v644
        %v646 = vmul.f32 %v643, %v645
        %v647 = vadd.f32 %v643, %v646
        %vm648 = vweird.f32 %v621
        %vm649 = vweird.f32 %v643
        %vm650 = vmor %vm648, %vm649
        %v651 = vsel %vm650, %v643, %v647
        %v652 = vand.u32 2147483647, %v621
        %vm653 = vcmp.eq.f32.partialorder %v652, 8.507059e+37
        %v654 = vand.u32 %v621, 2147483648
        %v655 = vor.u32 1.1754944e-38, %v654
        %v656 = vsel %vm653, %v655, %v651
        %v657 = vmul.f32 %v611, %v656
        %v658 = vrcp.pop %v624
        %v659 = vmul.f32 %v624, %v658
        %v660 = vsub.f32 1.0, %v659
        %v661 = vmul.f32 %v658, %v660
        %v662 = vadd.f32 %v658, %v661
        %vm663 = vweird.f32 %v624
        %vm664 = vweird.f32 %v658
        %vm665 = vmor %vm663, %vm664
        %v666 = vsel %vm665, %v658, %v662
        %v667 = vand.u32 2147483647, %v624
        %vm668 = vcmp.eq.f32.partialorder %v667, 8.507059e+37
        %v669 = vand.u32 %v624, 2147483648
        %v670 = vor.u32 1.1754944e-38, %v669
        %v671 = vsel %vm668, %v670, %v666
        %v672 = vmul.f32 %v613, %v671
        %v673 = vrcp.pop %v627
        %v674 = vmul.f32 %v627, %v673
        %v675 = vsub.f32 1.0, %v674
        %v676 = vmul.f32 %v673, %v675
        %v677 = vadd.f32 %v673, %v676
        %vm678 = vweird.f32 %v627
        %vm679 = vweird.f32 %v673
        %vm680 = vmor %vm678, %vm679
        %v681 = vsel %vm680, %v673, %v677
        %v682 = vand.u32 2147483647, %v627
        %vm683 = vcmp.eq.f32.partialorder %v682, 8.507059e+37
        %v684 = vand.u32 %v627, 2147483648
        %v685 = vor.u32 1.1754944e-38, %v684
        %v686 = vsel %vm683, %v685, %v681
        %v687 = vmul.f32 %v615, %v686
        %688 = vst.msk [vmem:[%s436] sm:$0xff] %vm489, %v642
        %689 = vst.msk [vmem:[%s436 + $0x8] sm:$0xff] %vm489, %v657
        %690 = vst.msk [vmem:[%s436 + $0x10] sm:$0xff] %vm489, %v672
        %691 = vst.msk [vmem:[%s436 + $0x18] sm:$0xff] %vm489, %v687
        %692 = vrot.lane.b32.xlu0 %v474, 64
        %v693 = vpop.permute.xlu0 %692
        %v696 = vsel %vm489, %v642, 0
        %698 = vmatpush.msra.mxu0 0.0
        %699 = vmatpush.msra.mxu0 0.0
        %700 = vmatpush.msra.mxu0 0.0
        %701 = vmatpush.msra.mxu0 0.0
        %702 = vmatpush.msra.mxu0 0.0
        %703 = vmatpush.msra.mxu0 0.0
        %704 = vmatpush.msra.mxu0 0.0
        %705 = vmatpush.msra.mxu0 0.0
        %706 = vmatpush.msra.mxu0 0.0
        %707 = vmatpush.msra.mxu0 0.0
        %708 = vmatpush.msra.mxu0 0.0
        %709 = vmatpush.msra.mxu0 0.0
        %710 = vmatpush.msra.mxu0 0.0
        %711 = vmatpush.msra.mxu0 0.0
        %712 = vmatpush.msra.mxu0 0.0
        %713 = vmatpush.msra.mxu0 %v693
        %714 = vmatmul.f32.gmra.mxu0 %v696
        %v715 = vpop.f32.mrf.mxu0
        %v716 = vadd.f32 0.0, %v715
        %717 = vdwg.mxu0
        %718 = vrot.lane.b32.xlu0 %v478, 64
        %v719 = vpop.permute.xlu0 %718
        %v722 = vsel %vm489, %v657, 0
        %724 = vmatpush.msra.mxu0 0.0
        %725 = vmatpush.msra.mxu0 0.0
        %726 = vmatpush.msra.mxu0 0.0
        %727 = vmatpush.msra.mxu0 0.0
        %728 = vmatpush.msra.mxu0 0.0
        %729 = vmatpush.msra.mxu0 0.0
        %730 = vmatpush.msra.mxu0 0.0
        %731 = vmatpush.msra.mxu0 0.0
        %732 = vmatpush.msra.mxu0 0.0
        %733 = vmatpush.msra.mxu0 0.0
        %734 = vmatpush.msra.mxu0 0.0
        %735 = vmatpush.msra.mxu0 0.0
        %736 = vmatpush.msra.mxu0 0.0
        %737 = vmatpush.msra.mxu0 0.0
        %738 = vmatpush.msra.mxu0 0.0
        %739 = vmatpush.msra.mxu0 %v719
        %740 = vmatmul.f32.gmra.mxu0 %v722
        %v741 = vpop.f32.mrf.mxu0
        %v742 = vadd.f32 0.0, %v741
        %743 = vdwg.mxu0
        %744 = vrot.lane.b32.xlu0 %v480, 64
        %v745 = vpop.permute.xlu0 %744
        %v748 = vsel %vm489, %v672, 0
        %750 = vmatpush.msra.mxu0 0.0
        %751 = vmatpush.msra.mxu0 0.0
        %752 = vmatpush.msra.mxu0 0.0
        %753 = vmatpush.msra.mxu0 0.0
        %754 = vmatpush.msra.mxu0 0.0
        %755 = vmatpush.msra.mxu0 0.0
        %756 = vmatpush.msra.mxu0 0.0
        %757 = vmatpush.msra.mxu0 0.0
        %758 = vmatpush.msra.mxu0 0.0
        %759 = vmatpush.msra.mxu0 0.0
        %760 = vmatpush.msra.mxu0 0.0
        %761 = vmatpush.msra.mxu0 0.0
        %762 = vmatpush.msra.mxu0 0.0
        %763 = vmatpush.msra.mxu0 0.0
        %764 = vmatpush.msra.mxu0 0.0
        %765 = vmatpush.msra.mxu0 %v745
        %766 = vmatmul.f32.gmra.mxu0 %v748
        %v767 = vpop.f32.mrf.mxu0
        %v768 = vadd.f32 0.0, %v767
        %769 = vdwg.mxu0
        %770 = vrot.lane.b32.xlu0 %v482, 64
        %v771 = vpop.permute.xlu0 %770
        %v774 = vsel %vm489, %v687, 0
        %776 = vmatpush.msra.mxu0 0.0
        %777 = vmatpush.msra.mxu0 0.0
        %778 = vmatpush.msra.mxu0 0.0
        %779 = vmatpush.msra.mxu0 0.0
        %780 = vmatpush.msra.mxu0 0.0
        %781 = vmatpush.msra.mxu0 0.0
        %782 = vmatpush.msra.mxu0 0.0
        %783 = vmatpush.msra.mxu0 0.0
        %784 = vmatpush.msra.mxu0 0.0
        %785 = vmatpush.msra.mxu0 0.0
        %786 = vmatpush.msra.mxu0 0.0
        %787 = vmatpush.msra.mxu0 0.0
        %788 = vmatpush.msra.mxu0 0.0
        %789 = vmatpush.msra.mxu0 0.0
        %790 = vmatpush.msra.mxu0 0.0
        %791 = vmatpush.msra.mxu0 %v771
        %792 = vmatmul.f32.gmra.mxu0 %v774
        %v793 = vpop.f32.mrf.mxu0
        %v794 = vadd.f32 0.0, %v793
        %795 = vdwg.mxu0
        %v796 = vld [vmem:[%s4] sm:$0xff]
        %v797 = vld [vmem:[%s4 + $0x8] sm:$0xff]
        %v798 = vld [vmem:[%s4 + $0x10] sm:$0xff]
        %v799 = vld [vmem:[%s4 + $0x18] sm:$0xff]
        %v801 = vsel %vm489, %v716, 0
        %803 = vmatpush.msra.mxu0 0.0
        %804 = vmatpush.msra.mxu0 0.0
        %805 = vmatpush.msra.mxu0 0.0
        %806 = vmatpush.msra.mxu0 0.0
        %807 = vmatpush.msra.mxu0 0.0
        %808 = vmatpush.msra.mxu0 0.0
        %809 = vmatpush.msra.mxu0 0.0
        %810 = vmatpush.msra.mxu0 0.0
        %811 = vmatpush.msra.mxu0 0.0
        %812 = vmatpush.msra.mxu0 0.0
        %813 = vmatpush.msra.mxu0 0.0
        %814 = vmatpush.msra.mxu0 0.0
        %815 = vmatpush.msra.mxu0 0.0
        %816 = vmatpush.msra.mxu0 0.0
        %817 = vmatpush.msra.mxu0 0.0
        %818 = vmatpush.msra.mxu0 %v796
        %819 = vmatmul.f32.gmra.mxu0 %v801
        %v820 = vpop.f32.mrf.mxu0
        %v821 = vadd.f32 0.0, %v820
        %822 = vdwg.mxu0
        %v824 = vsel %vm489, %v742, 0
        %826 = vmatpush.msra.mxu0 0.0
        %827 = vmatpush.msra.mxu0 0.0
        %828 = vmatpush.msra.mxu0 0.0
        %829 = vmatpush.msra.mxu0 0.0
        %830 = vmatpush.msra.mxu0 0.0
        %831 = vmatpush.msra.mxu0 0.0
        %832 = vmatpush.msra.mxu0 0.0
        %833 = vmatpush.msra.mxu0 0.0
        %834 = vmatpush.msra.mxu0 0.0
        %835 = vmatpush.msra.mxu0 0.0
        %836 = vmatpush.msra.mxu0 0.0
        %837 = vmatpush.msra.mxu0 0.0
        %838 = vmatpush.msra.mxu0 0.0
        %839 = vmatpush.msra.mxu0 0.0
        %840 = vmatpush.msra.mxu0 0.0
        %841 = vmatpush.msra.mxu0 %v797
        %842 = vmatmul.f32.gmra.mxu0 %v824
        %v843 = vpop.f32.mrf.mxu0
        %v844 = vadd.f32 0.0, %v843
        %845 = vdwg.mxu0
        %v847 = vsel %vm489, %v768, 0
        %849 = vmatpush.msra.mxu0 0.0
        %850 = vmatpush.msra.mxu0 0.0
        %851 = vmatpush.msra.mxu0 0.0
        %852 = vmatpush.msra.mxu0 0.0
        %853 = vmatpush.msra.mxu0 0.0
        %854 = vmatpush.msra.mxu0 0.0
        %855 = vmatpush.msra.mxu0 0.0
        %856 = vmatpush.msra.mxu0 0.0
        %857 = vmatpush.msra.mxu0 0.0
        %858 = vmatpush.msra.mxu0 0.0
        %859 = vmatpush.msra.mxu0 0.0
        %860 = vmatpush.msra.mxu0 0.0
        %861 = vmatpush.msra.mxu0 0.0
        %862 = vmatpush.msra.mxu0 0.0
        %863 = vmatpush.msra.mxu0 0.0
        %864 = vmatpush.msra.mxu0 %v798
        %865 = vmatmul.f32.gmra.mxu0 %v847
        %v866 = vpop.f32.mrf.mxu0
        %v867 = vadd.f32 0.0, %v866
        %868 = vdwg.mxu0
        %v870 = vsel %vm489, %v794, 0
        %872 = vmatpush.msra.mxu0 0.0
        %873 = vmatpush.msra.mxu0 0.0
        %874 = vmatpush.msra.mxu0 0.0
        %875 = vmatpush.msra.mxu0 0.0
        %876 = vmatpush.msra.mxu0 0.0
        %877 = vmatpush.msra.mxu0 0.0
        %878 = vmatpush.msra.mxu0 0.0
        %879 = vmatpush.msra.mxu0 0.0
        %880 = vmatpush.msra.mxu0 0.0
        %881 = vmatpush.msra.mxu0 0.0
        %882 = vmatpush.msra.mxu0 0.0
        %883 = vmatpush.msra.mxu0 0.0
        %884 = vmatpush.msra.mxu0 0.0
        %885 = vmatpush.msra.mxu0 0.0
        %886 = vmatpush.msra.mxu0 0.0
        %887 = vmatpush.msra.mxu0 %v799
        %888 = vmatmul.f32.gmra.mxu0 %v870
        %v889 = vpop.f32.mrf.mxu0
        %v890 = vadd.f32 0.0, %v889
        %891 = vdwg.mxu0
        %v892 = vsel %vm452, %v821, 0.0
        %v893 = vsel %vm452, %v844, 0.0
        %v894 = vadd.f32 %v892, %v893
        %v895 = vsel %vm452, %v867, 0.0
        %v896 = vadd.f32 %v894, %v895
        %v897 = vsel %vm452, %v890, 0.0
        %v898 = vadd.f32 %v896, %v897
        %v899 = vperm.slane %v438, 0
        %v900 = vadd.f32 %v898, %v899
        %v901 = vadd.f32 %v900, %v437
        %v902 = vsel %vm452, %v901, 0.0
        %903 = vadd.xlane.f32.xlu0 %v902
        %v904 = vpop.xlane.xlu0 %903
        %v905 = vrcp.pop 32.0
        %v906 = vmul.f32 32.0, %v905
        %v907 = vsub.f32 1.0, %v906
        %v908 = vmul.f32 %v905, %v907
        %v909 = vadd.f32 %v905, %v908
        %vm910 = vweird.f32 %v905
        %v911 = vsel %vm910, %v905, %v909
        %v912 = vmul.f32 %v904, %v911
        %v913 = vsub.f32 %v901, %v912
        %v914 = vmul.f32 %v913, %v913
        %v915 = vsel %vm452, %v914, 0.0
        %916 = vadd.xlane.f32.xlu0 %v915
        %v917 = vpop.xlane.xlu0 %916
        %v918 = vmul.f32 %v917, %v911
        %v919 = vadd.f32 %v918, 1e-05
        %v920 = vrsqrt.pop %v919
        %v921 = vmul.f32 %v920, %v919
        %v922 = vmul.f32 %v921, %v920
        %v923 = vmul.f32 0.5, %v922
        %v924 = vsub.f32 1.5, %v923
        %v925 = vmul.f32 %v920, %v924
        %vm926 = vweird.f32 %v919
        %vm927 = vweird.f32 %v920
        %vm928 = vmor %vm926, %vm927
        %v929 = vsel %vm928, %v920, %v925
        %v930 = vmul.f32 %v913, %v929
        %v931 = vperm.slane %v440, 0
        %v932 = vmul.f32 %v930, %v931
        %v933 = vperm.slane %v441, 0
        %v934 = vadd.f32 %v932, %v933
        %v935 = vld [vmem:[%s5] sm:$0xff]
        %v936 = vld [vmem:[%s5 + $0x8] sm:$0xff]
        %v937 = vld [vmem:[%s5 + $0x10] sm:$0xff]
        %v938 = vld [vmem:[%s5 + $0x18] sm:$0xff]
        %v939 = vld [vmem:[%s6] sm:$0x1]
        %v941 = vperm.slane %v939, 0
        %v944 = vsel %vm452, %v934, 0
        %946 = vmatpush.msra.mxu0 0.0
        %947 = vmatpush.msra.mxu0 0.0
        %948 = vmatpush.msra.mxu0 0.0
        %949 = vmatpush.msra.mxu0 0.0
        %950 = vmatpush.msra.mxu0 0.0
        %951 = vmatpush.msra.mxu0 0.0
        %952 = vmatpush.msra.mxu0 0.0
        %953 = vmatpush.msra.mxu0 0.0
        %954 = vmatpush.msra.mxu0 0.0
        %955 = vmatpush.msra.mxu0 0.0
        %956 = vmatpush.msra.mxu0 0.0
        %957 = vmatpush.msra.mxu0 0.0
        %958 = vmatpush.msra.mxu0 %v938
        %959 = vmatpush.msra.mxu0 %v937
        %960 = vmatpush.msra.mxu0 %v936
        %961 = vmatpush.msra.mxu0 %v935
        %962 = vmatmul.f32.gmra.mxu0 %v944
        %v963 = vpop.f32.mrf.mxu0
        %v964 = vadd.f32 %v941, %v963
        %965 = vdwg.mxu0
        %v966 = vmax.f32 %v964, 0.0
        %v967 = vld [vmem:[%s7] sm:$0xff]
        %v968 = vld [vmem:[%s7 + $0x8] sm:$0xff]
        %v969 = vld [vmem:[%s7 + $0x10] sm:$0xff]
        %v970 = vld [vmem:[%s7 + $0x18] sm:$0xff]
        %v971 = vld [vmem:[%s7 + $0x20] sm:$0xff]
        %v972 = vld [vmem:[%s7 + $0x28] sm:$0xff]
        %v973 = vld [vmem:[%s7 + $0x30] sm:$0xff]
        %v974 = vld [vmem:[%s7 + $0x38] sm:$0xff]
        %v975 = vperm.slane %v439, 0
        %vm976 = vcmask 523264
        %v978 = vsel %vm976, %v966, 0
        %980 = vmatpush.msra.mxu0 0.0
        %981 = vmatpush.msra.mxu0 0.0
        %982 = vmatpush.msra.mxu0 0.0
        %983 = vmatpush.msra.mxu0 0.0
        %984 = vmatpush.msra.mxu0 0.0
        %985 = vmatpush.msra.mxu0 0.0
        %986 = vmatpush.msra.mxu0 0.0
        %987 = vmatpush.msra.mxu0 0.0
        %988 = vmatpush.msra.mxu0 %v974
        %989 = vmatpush.msra.mxu0 %v973
        %990 = vmatpush.msra.mxu0 %v972
        %991 = vmatpush.msra.mxu0 %v971
        %992 = vmatpush.msra.mxu0 %v970
        %993 = vmatpush.msra.mxu0 %v969
        %994 = vmatpush.msra.mxu0 %v968
        %995 = vmatpush.msra.mxu0 %v967
        %996 = vmatmul.f32.gmra.mxu0 %v978
        %v997 = vpop.f32.mrf.mxu0
        %v998 = vadd.f32 %v975, %v997
        %999 = vdwg.mxu0
        %v1000 = vadd.f32 %v998, %v934
        %v1001 = vsel %vm452, %v1000, 0.0
        %1002 = vadd.xlane.f32.xlu0 %v1001
        %v1003 = vpop.xlane.xlu0 %1002
        %v1004 = vmul.f32 %v1003, %v911
        %v1005 = vsub.f32 %v1000, %v1004
        %v1006 = vmul.f32 %v1005, %v1005
        %v1007 = vsel %vm452, %v1006, 0.0
        %1008 = vadd.xlane.f32.xlu0 %v1007
        %v1009 = vpop.xlane.xlu0 %1008
        %v1010 = vmul.f32 %v1009, %v911
        %v1011 = vadd.f32 %v1010, 1e-05
        %v1012 = vrsqrt.pop %v1011
        %v1013 = vmul.f32 %v1012, %v1011
        %v1014 = vmul.f32 %v1013, %v1012
        %v1015 = vmul.f32 0.5, %v1014
        %v1016 = vsub.f32 1.5, %v1015
        %v1017 = vmul.f32 %v1012, %v1016
        %vm1018 = vweird.f32 %v1011
        %vm1019 = vweird.f32 %v1012
        %vm1020 = vmor %vm1018, %vm1019
        %v1021 = vsel %vm1020, %v1012, %v1017
        %v1022 = vmul.f32 %v1005, %v1021
        %v1023 = vperm.slane %v442, 0
        %v1024 = vmul.f32 %v1022, %v1023
        %v1025 = vperm.slane %v443, 0
        %v1026 = vadd.f32 %v1024, %v1025
        %1027 = vst.msk [vmem:[%s429] sm:$0xff] %vm452, %v1026
        %s1028 = sand.u32 %s241, 1
        %s1029 = scalar_lea.sflag [#allocation4], %s1028
        %s1030 = sand.u32 %s241, 1
        %s1031 = smul.addr %s1030, 8
        %s1032 = scalar_lea.vmem [#allocation8], %s1031
        %s1033 = sand.u32 %s267, 1
        %s1034 = scalar_lea.sflag [#allocation10], %s1033
        %s1035 = sand.u32 %s267, 1
        %s1036 = smul.addr %s1035, 32
        %s1037 = scalar_lea.vmem [#allocation9], %s1036
        // Predicated region
        $region69: #{tpu_custom_call.1} parent=55 // pred_check
          %p1038 = pneg %p251
        $region70: #{tpu_custom_call.1} parent=55 // pred_check_branch
          %1040 = sbr.rel (%p1038) target = $region72
        $region71: #{tpu_custom_call.1} parent=55 // pred_region
          %1042 = vsyncadd %s1029, 0
          %s1043 = smul.addr %s34, 8
          %s1044 = scalar_lea.hbm %s9, %s1043
          %s1046 = sshll.u32 %s1032, 4
          %s1047 = int_to_ptr.vmem [resolvable:$true] %s1046
          %s1048 = sshll.u32 %s1044, 4
          %s1049 = int_to_ptr.hbm [resolvable:$true] %s1048
          %1051 = dma.vmem_to_hbm [thread:$0]  %s1047, 128, %s1049, %s1029
        $region72: #{tpu_custom_call.1} parent=55 // pred_fallthru
          _
        // Predicated region
        $region73: #{tpu_custom_call.1} parent=55 // pred_check
          %p1052 = pneg %p277
        $region74: #{tpu_custom_call.1} parent=55 // pred_check_branch
          %1054 = sbr.rel (%p1052) target = $region76
        $region75: #{tpu_custom_call.1} parent=55 // pred_region
          %1056 = vsyncadd %s1034, 0
          %s1057 = smul.addr %s34, 8
          %s1058 = scalar_lea.hbm %s10, %s1057
          %s1059 = sshll.u32 %s1037, 4
          %s1060 = int_to_ptr.vmem [resolvable:$true] %s1059
          %s1061 = sshll.u32 %s1058, 4
          %s1062 = int_to_ptr.hbm [resolvable:$true] %s1061
          %1067 = dma.vmem_to_hbm [thread:$0]  %s1060, 512, %s1062, %s1034, 128, 256, 8
        $region76: #{tpu_custom_call.1} parent=55 // pred_fallthru
          _
      $region56: #{tpu_custom_call.1} parent=5 // pred_fallthru
        _
      %p1068 = scmp.le.s32.totalorder 2, %s29
      // Predicated region
      $region77: #{tpu_custom_call.1} parent=5 // pred_check
        %p1069 = pneg %p1068
      $region78: #{tpu_custom_call.1} parent=5 // pred_check_branch
        %1071 = sbr.rel (%p1069) target = $region80
      $region79: #{tpu_custom_call.1} parent=5 // pred_region
        %s1072 = ssub.s32 %s29, 2
        // Predicated region
        $region81: #{tpu_custom_call.1} parent=79 // pred_check
          %p1073 = pneg %p257
        $region82: #{tpu_custom_call.1} parent=79 // pred_check_branch
          %1075 = sbr.rel (%p1073) target = $region84
        $region83: #{tpu_custom_call.1} parent=79 // pred_region
          %s1076 = sand.u32 %s242, 1
          %s1077 = scalar_lea.sflag [#allocation4], %s1076
          %s1078 = sand.u32 %s242, 1
          %s1079 = smul.addr %s1078, 8
          %s1080 = scalar_lea.vmem [#allocation8], %s1079
          %1082 = dma.done %s1077, 128
        $region84: #{tpu_custom_call.1} parent=79 // pred_fallthru
          _
        // Predicated region
        $region85: #{tpu_custom_call.1} parent=79 // pred_check
          %p1083 = pneg %p283
        $region86: #{tpu_custom_call.1} parent=79 // pred_check_branch
          %1085 = sbr.rel (%p1083) target = $region88
        $region87: #{tpu_custom_call.1} parent=79 // pred_region
          %s1086 = sand.u32 %s268, 1
          %s1087 = scalar_lea.sflag [#allocation10], %s1086
          %s1088 = sand.u32 %s268, 1
          %s1089 = smul.addr %s1088, 32
          %s1090 = scalar_lea.vmem [#allocation9], %s1089
          %1092 = dma.done %s1087, 512
        $region88: #{tpu_custom_call.1} parent=79 // pred_fallthru
          _
      $region80: #{tpu_custom_call.1} parent=5 // pred_fallthru
        _
    $region6: #{tpu_custom_call.1} parent=1 // loop_footer
      %s33 = sadd.s32 1, %s29
    $region7: #{tpu_custom_call.1} parent=1 // loop_footer_branch
      %28 = sbr.rel target = $region3
    $region8: #{tpu_custom_call.1} parent=1 // loop_exit
      _
    %1093 = vsyncpa [#allocation3], 1
    %s1094 = scalar_lea.sflag [#allocation3], 1
    %1095 = vsyncpa %s1094, 1
    %1096 = vsyncpa [#allocation6], 1
    %s1097 = scalar_lea.sflag [#allocation6], 1
    %1098 = vsyncpa %s1097, 1
    %1099 = vsyncpa [#allocation4], 1
    %s1100 = scalar_lea.sflag [#allocation4], 1
    %1101 = vsyncpa %s1100, 1
    %1102 = vsyncpa [#allocation10], 1
    %s1103 = scalar_lea.sflag [#allocation10], 1
    %1104 = vsyncpa %s1103, 1

</llo_original>
